<compile_context>
chip_gen: v6e
topology: v6e:2x2x1
jax: 0.10.0
libtpu: 0.0.40
codegen_flags: <defaults>
</compile_context>

<pallas_src>
import math

import jax
import jax.numpy as jnp
from jax import lax
from jax.experimental import pallas as pl
from jax.experimental.pallas import tpu as pltpu

# ---------------------------------------------------------------------------
# Module hyper-parameters (AngularSymmetryFunction.__init__, deterministic)
# ---------------------------------------------------------------------------
MAX_INTERACTION_RADIUS_NM = 0.35          # maximum_interaction_radius -> nm
MIN_DISTANCE_NM = 0.08                    # min_distance -> nm
NUM_GAUSSIANS_ASF = 8                     # number_of_gaussians_for_asf
ANGLE_SECTIONS = 4                        # angle_sections
ETA_A = 12.5 * 100                        # EtaA = 1250.0
ZETA = 14.1                               # Zeta
RCA = MAX_INTERACTION_RADIUS_NM           # Rca (cosine cutoff)
COS_SIM_EPS = 1e-8                        # torch cosine_similarity eps
ANGULAR_SUBLENGTH = NUM_GAUSSIANS_ASF * ANGLE_SECTIONS   # 32

_ANGLE_START = math.pi / (2 * ANGLE_SECTIONS)
_SHFA_STEP = (RCA - MIN_DISTANCE_NM) / NUM_GAUSSIANS_ASF   # linspace step
_SHFZ_STEP = math.pi / ANGLE_SECTIONS                      # linspace step

TP = 1024  # pairs per grid step (lane tile; multiple of 128)


# ---------------------------------------------------------------------------
# Pallas kernel: per-pair distances / angle / cutoff, factored channel math,
# writes a lane-dense (ANGLE_SECTIONS, NUM_GAUSSIANS_ASF, TP) sub-AEV tile.
# ---------------------------------------------------------------------------
def _asf_kernel(vec_ref, out_ref):
    v = vec_ref[...].astype(jnp.float32)          # (6, TP)
    x1, y1, z1 = v[0:1], v[1:2], v[2:3]           # (1, TP) each
    x2, y2, z2 = v[3:4], v[4:5], v[5:6]

    # distances12 = ||v||_2 over the coordinate axis
    d1 = jnp.sqrt(x1 * x1 + y1 * y1 + z1 * z1)    # (1, TP)
    d2 = jnp.sqrt(x2 * x2 + y2 * y2 + z2 * z2)    # (1, TP)
    dot = x1 * x2 + y1 * y2 + z1 * z2             # (1, TP)

    # cos_angles = 0.95 * cosine_similarity(v1, v2)
    cos_ang = 0.95 * dot / jnp.maximum(d1 * d2, COS_SIM_EPS)          # (1, TP)
    sin_ang = jnp.sqrt(jnp.maximum(1.0 - cos_ang * cos_ang, 0.0))     # (1, TP)

    # Behler cosine cutoff: 0.5*(cos(pi*d/Rca)+1) * (d < Rca)
    def fcut(d):
        return (0.5 * (jnp.cos(d * (math.pi / RCA)) + 1.0)
                * (d < RCA).astype(jnp.float32))

    two_fcj = 2.0 * fcut(d1) * fcut(d2)           # 2 * prod of cutoffs, (1, TP)
    d_avg = 0.5 * (d1 + d2)                       # (1, TP)

    # Channel constants rebuilt in-kernel (no DMA): ShfA on 8 sublanes,
    # ShfZ (via sin/cos) on 4 sublanes.
    a_idx = lax.broadcasted_iota(jnp.int32, (NUM_GAUSSIANS_ASF, 1), 0).astype(jnp.float32)
    shfa = MIN_DISTANCE_NM + a_idx * _SHFA_STEP                        # (8, 1)
    z_idx = lax.broadcasted_iota(jnp.int32, (ANGLE_SECTIONS, 1), 0).astype(jnp.float32)
    shfz = _ANGLE_START + z_idx * _SHFZ_STEP                           # (4, 1)
    cosz = jnp.cos(shfz)                                               # (4, 1)
    sinz = jnp.cos(shfz - (math.pi / 2.0))                             # sin(shfz), via cos

    # Factored channel math (EUP work only on 8 + 4 rows, not 32):
    #   g[a]  = 2 * fcj * exp(-EtaA * (d_avg - ShfA[a])^2)     -> (8, TP)
    #   f1[z] = ((1 + cos(acos(c) - ShfZ[z])) / 2) ** Zeta     -> (4, TP)
    diff = d_avg - shfa                                                # (8, TP)
    g = two_fcj * jnp.exp(-ETA_A * diff * diff)                        # (8, TP)
    base = (1.0 + cos_ang * cosz + sin_ang * sinz) * 0.5               # (4, TP)
    f1 = base ** ZETA                                                  # (4, TP)

    # Outer product over channels: out[z, a, p] = f1[z, p] * g[a, p].
    # Written as 4 dense (8, TP) tiles -> unmasked, fully lane-dense stores.
    for z in range(ANGLE_SECTIONS):
        out_ref[z] = (f1[z:z + 1, :] * g).astype(out_ref.dtype)


# ---------------------------------------------------------------------------
# Wrapper (layout plumbing: pairs-on-lanes view, padding, pallas_call,
# transpose back to the torch output layout).
# ---------------------------------------------------------------------------
def angular_symmetry_function(r_ij: jax.Array) -> jax.Array:
    """r_ij: (2, n_pairs, 3) float32 -> sub-AEV (n_pairs, 32) float32."""
    assert r_ij.ndim == 3 and r_ij.shape[0] == 2 and r_ij.shape[2] == 3
    n_pairs = r_ij.shape[1]

    # Pairs-on-lanes slab: rows 0..2 = v1.xyz, rows 3..5 = v2.xyz.
    vec6 = jnp.transpose(r_ij, (0, 2, 1)).reshape(6, n_pairs).astype(jnp.float32)

    # Pad the pair (lane) axis to a multiple of TP if needed.
    n_pad = (-n_pairs) % TP
    if n_pad:
        vec6 = jnp.pad(vec6, ((0, 0), (0, n_pad)))
    p_total = n_pairs + n_pad
    grid = (p_total // TP,)

    out3 = pl.pallas_call(
        _asf_kernel,
        out_shape=jax.ShapeDtypeStruct(
            (ANGLE_SECTIONS, NUM_GAUSSIANS_ASF, p_total), jnp.float32),
        grid=grid,
        in_specs=[
            pl.BlockSpec((6, TP), lambda i: (0, i)),                   # pair vectors
        ],
        out_specs=pl.BlockSpec(
            (ANGLE_SECTIONS, NUM_GAUSSIANS_ASF, TP), lambda i: (0, 0, i)),
        compiler_params=pltpu.CompilerParams(dimension_semantics=("parallel",)),
    )(vec6)

    # (4, 8, P) -> (P, 8, 4) -> (P, 32); channel k = a*ANGLE_SECTIONS + z,
    # matching torch's flatten(start_dim=-4) ordering (ShfA-major, ShfZ-minor).
    out = jnp.transpose(out3[:, :, :n_pairs], (2, 1, 0))
    return out.reshape(n_pairs, ANGULAR_SUBLENGTH)


# ---------------------------------------------------------------------------
# Pure-JAX reference mirroring the PyTorch broadcasting exactly
# ---------------------------------------------------------------------------
def _reference(r_ij: jax.Array) -> jax.Array:
    shfz = (jnp.linspace(0.0, math.pi, ANGLE_SECTIONS + 1, dtype=jnp.float32)
            + _ANGLE_START)[:-1]                                        # (4,)
    shfa = jnp.linspace(MIN_DISTANCE_NM, RCA, NUM_GAUSSIANS_ASF + 1,
                        dtype=jnp.float32)[:-1]                          # (8,)

    v1, v2 = r_ij[0], r_ij[1]                                            # (P, 3)
    d1 = jnp.sqrt(jnp.sum(v1 * v1, axis=-1))
    d2 = jnp.sqrt(jnp.sum(v2 * v2, axis=-1))
    cos_ang = 0.95 * jnp.sum(v1 * v2, axis=-1) / jnp.maximum(d1 * d2, COS_SIM_EPS)
    angles = jnp.arccos(cos_ang)                                         # (P,)

    def fcut(d):
        return 0.5 * (jnp.cos(d * math.pi / RCA) + 1.0) * (d < RCA).astype(jnp.float32)

    factor1 = ((1.0 + jnp.cos(angles[:, None, None] - shfz[None, None, :])) / 2.0) ** ZETA
    factor2 = jnp.exp(-ETA_A * (0.5 * (d1 + d2)[:, None, None] - shfa[None, :, None]) ** 2)
    fcj = (fcut(d1) * fcut(d2))[:, None, None]
    ret = 2.0 * factor1 * factor2 * fcj                                  # (P, 8, 4)
    return ret.reshape(r_ij.shape[1], ANGULAR_SUBLENGTH)


if __name__ == "__main__":
    key = jax.random.PRNGKey(0)
    n_pairs = 4096   # multiple of TP -> no padding; 4 grid steps (megacore-friendly)
    # r_ij: two displacement vectors per neighbor pair (nm), shape (2, n_pairs, 3)
    r_ij = 0.15 * jax.random.normal(key, (2, n_pairs, 3), dtype=jnp.float32)

    sub_aev = angular_symmetry_function(r_ij)
    sub_aev = jax.block_until_ready(sub_aev)

    ref = _reference(r_ij)
    assert sub_aev.shape == (n_pairs, ANGULAR_SUBLENGTH)
    assert jnp.allclose(sub_aev, ref, rtol=2e-4, atol=1e-6), (
        float(jnp.max(jnp.abs(sub_aev - ref))))

    print("KERNEL_OK")
</pallas_src>

<mosaic_0001>
module attributes {stable_mosaic.version = 11 : i64} {
  func.func @_asf_kernel(%arg0: i32, %arg1: memref<6x1024xf32, #tpu.memory_space<vmem>>, %arg2: memref<4x8x1024xf32, #tpu.memory_space<vmem>>) attributes {dimension_semantics = [#tpu.dimension_semantics<parallel>], iteration_bounds = array<i64: 4>, scalar_prefetch = 0 : i64, scratch_operands = 0 : i64, tpu.core_type = #tpu.core_type<tc>, window_params = [{transform_indices = @transform_0, window_bounds = array<i64: 6, 1024>}, {transform_indices = @transform_1, window_bounds = array<i64: 4, 8, 1024>}]} {
    %c0 = arith.constant 0 : index
    %c0_0 = arith.constant 0 : index
    %0 = vector.load %arg1[%c0, %c0_0] : memref<6x1024xf32, #tpu.memory_space<vmem>>, vector<6x1024xf32>
    %1 = vector.extract_strided_slice %0 {offsets = [0, 0], sizes = [1, 1024], strides = [1, 1]} : vector<6x1024xf32> to vector<1x1024xf32>
    %2 = vector.extract_strided_slice %0 {offsets = [1, 0], sizes = [1, 1024], strides = [1, 1]} : vector<6x1024xf32> to vector<1x1024xf32>
    %3 = vector.extract_strided_slice %0 {offsets = [2, 0], sizes = [1, 1024], strides = [1, 1]} : vector<6x1024xf32> to vector<1x1024xf32>
    %4 = vector.extract_strided_slice %0 {offsets = [3, 0], sizes = [1, 1024], strides = [1, 1]} : vector<6x1024xf32> to vector<1x1024xf32>
    %5 = vector.extract_strided_slice %0 {offsets = [4, 0], sizes = [1, 1024], strides = [1, 1]} : vector<6x1024xf32> to vector<1x1024xf32>
    %6 = vector.extract_strided_slice %0 {offsets = [5, 0], sizes = [1, 1024], strides = [1, 1]} : vector<6x1024xf32> to vector<1x1024xf32>
    %7 = arith.mulf %1, %1 : vector<1x1024xf32>
    %8 = arith.mulf %2, %2 : vector<1x1024xf32>
    %9 = arith.addf %7, %8 : vector<1x1024xf32>
    %10 = arith.mulf %3, %3 : vector<1x1024xf32>
    %11 = arith.addf %9, %10 : vector<1x1024xf32>
    %12 = math.sqrt %11 : vector<1x1024xf32>
    %13 = arith.mulf %4, %4 : vector<1x1024xf32>
    %14 = arith.mulf %5, %5 : vector<1x1024xf32>
    %15 = arith.addf %13, %14 : vector<1x1024xf32>
    %16 = arith.mulf %6, %6 : vector<1x1024xf32>
    %17 = arith.addf %15, %16 : vector<1x1024xf32>
    %18 = math.sqrt %17 : vector<1x1024xf32>
    %19 = arith.mulf %1, %4 : vector<1x1024xf32>
    %20 = arith.mulf %2, %5 : vector<1x1024xf32>
    %21 = arith.addf %19, %20 : vector<1x1024xf32>
    %22 = arith.mulf %3, %6 : vector<1x1024xf32>
    %23 = arith.addf %21, %22 : vector<1x1024xf32>
    %cst = arith.constant 0.949999988 : f32
    %24 = vector.broadcast %cst : f32 to vector<1x1024xf32>
    %25 = arith.mulf %24, %23 : vector<1x1024xf32>
    %26 = arith.mulf %12, %18 : vector<1x1024xf32>
    %cst_1 = arith.constant 9.99999993E-9 : f32
    %27 = vector.broadcast %cst_1 : f32 to vector<1x1024xf32>
    %28 = arith.maximumf %26, %27 : vector<1x1024xf32>
    %29 = arith.divf %25, %28 : vector<1x1024xf32>
    %30 = arith.mulf %29, %29 : vector<1x1024xf32>
    %cst_2 = arith.constant 1.000000e+00 : f32
    %31 = vector.broadcast %cst_2 : f32 to vector<1x1024xf32>
    %32 = arith.subf %31, %30 : vector<1x1024xf32>
    %cst_3 = arith.constant 0.000000e+00 : f32
    %33 = vector.broadcast %cst_3 : f32 to vector<1x1024xf32>
    %34 = arith.maximumf %32, %33 : vector<1x1024xf32>
    %35 = math.sqrt %34 : vector<1x1024xf32>
    %cst_4 = arith.constant 8.97597885 : f32
    %36 = vector.broadcast %cst_4 : f32 to vector<1x1024xf32>
    %37 = arith.mulf %12, %36 : vector<1x1024xf32>
    %38 = math.cos %37 : vector<1x1024xf32>
    %cst_5 = arith.constant 1.000000e+00 : f32
    %39 = vector.broadcast %cst_5 : f32 to vector<1x1024xf32>
    %40 = arith.addf %38, %39 : vector<1x1024xf32>
    %cst_6 = arith.constant 5.000000e-01 : f32
    %41 = vector.broadcast %cst_6 : f32 to vector<1x1024xf32>
    %42 = arith.mulf %41, %40 : vector<1x1024xf32>
    %cst_7 = arith.constant 3.500000e-01 : f32
    %43 = vector.broadcast %cst_7 : f32 to vector<1x1024xf32>
    %44 = arith.cmpf olt, %12, %43 : vector<1x1024xf32>
    %45 = arith.extui %44 : vector<1x1024xi1> to vector<1x1024xi32>
    %46 = arith.sitofp %45 : vector<1x1024xi32> to vector<1x1024xf32>
    %47 = arith.mulf %42, %46 : vector<1x1024xf32>
    %cst_8 = arith.constant 2.000000e+00 : f32
    %48 = vector.broadcast %cst_8 : f32 to vector<1x1024xf32>
    %49 = arith.mulf %48, %47 : vector<1x1024xf32>
    %cst_9 = arith.constant 8.97597885 : f32
    %50 = vector.broadcast %cst_9 : f32 to vector<1x1024xf32>
    %51 = arith.mulf %18, %50 : vector<1x1024xf32>
    %52 = math.cos %51 : vector<1x1024xf32>
    %cst_10 = arith.constant 1.000000e+00 : f32
    %53 = vector.broadcast %cst_10 : f32 to vector<1x1024xf32>
    %54 = arith.addf %52, %53 : vector<1x1024xf32>
    %cst_11 = arith.constant 5.000000e-01 : f32
    %55 = vector.broadcast %cst_11 : f32 to vector<1x1024xf32>
    %56 = arith.mulf %55, %54 : vector<1x1024xf32>
    %cst_12 = arith.constant 3.500000e-01 : f32
    %57 = vector.broadcast %cst_12 : f32 to vector<1x1024xf32>
    %58 = arith.cmpf olt, %18, %57 : vector<1x1024xf32>
    %59 = arith.extui %58 : vector<1x1024xi1> to vector<1x1024xi32>
    %60 = arith.sitofp %59 : vector<1x1024xi32> to vector<1x1024xf32>
    %61 = arith.mulf %56, %60 : vector<1x1024xf32>
    %62 = arith.mulf %49, %61 : vector<1x1024xf32>
    %63 = arith.addf %12, %18 : vector<1x1024xf32>
    %cst_13 = arith.constant 5.000000e-01 : f32
    %64 = vector.broadcast %cst_13 : f32 to vector<1x1024xf32>
    %65 = arith.mulf %64, %63 : vector<1x1024xf32>
    %66 = tpu.iota {dimensions = array<i32: 0>} : vector<8x1xi32>
    %67 = arith.sitofp %66 : vector<8x1xi32> to vector<8x1xf32>
    %cst_14 = arith.constant 3.375000e-02 : f32
    %68 = vector.broadcast %cst_14 : f32 to vector<8x1xf32>
    %69 = arith.mulf %67, %68 : vector<8x1xf32>
    %cst_15 = arith.constant 8.000000e-02 : f32
    %70 = vector.broadcast %cst_15 : f32 to vector<8x1xf32>
    %71 = arith.addf %70, %69 : vector<8x1xf32>
    %72 = tpu.iota {dimensions = array<i32: 0>} : vector<4x1xi32>
    %73 = arith.sitofp %72 : vector<4x1xi32> to vector<4x1xf32>
    %cst_16 = arith.constant 0.785398185 : f32
    %74 = vector.broadcast %cst_16 : f32 to vector<4x1xf32>
    %75 = arith.mulf %73, %74 : vector<4x1xf32>
    %cst_17 = arith.constant 0.392699093 : f32
    %76 = vector.broadcast %cst_17 : f32 to vector<4x1xf32>
    %77 = arith.addf %76, %75 : vector<4x1xf32>
    %78 = math.cos %77 : vector<4x1xf32>
    %cst_18 = arith.constant 1.57079637 : f32
    %79 = vector.broadcast %cst_18 : f32 to vector<4x1xf32>
    %80 = arith.subf %77, %79 : vector<4x1xf32>
    %81 = math.cos %80 : vector<4x1xf32>
    %82 = vector.broadcast %65 : vector<1x1024xf32> to vector<8x1024xf32>
    %83 = vector.broadcast %71 : vector<8x1xf32> to vector<8x1024xf32>
    %84 = arith.subf %82, %83 : vector<8x1024xf32>
    %cst_19 = arith.constant -1.250000e+03 : f32
    %85 = vector.broadcast %cst_19 : f32 to vector<8x1024xf32>
    %86 = arith.mulf %85, %84 : vector<8x1024xf32>
    %87 = arith.mulf %86, %84 : vector<8x1024xf32>
    %88 = math.exp %87 : vector<8x1024xf32>
    %89 = vector.broadcast %62 : vector<1x1024xf32> to vector<8x1024xf32>
    %90 = arith.mulf %89, %88 : vector<8x1024xf32>
    %91 = vector.broadcast %29 : vector<1x1024xf32> to vector<4x1024xf32>
    %92 = vector.broadcast %78 : vector<4x1xf32> to vector<4x1024xf32>
    %93 = arith.mulf %91, %92 : vector<4x1024xf32>
    %cst_20 = arith.constant 1.000000e+00 : f32
    %94 = vector.broadcast %cst_20 : f32 to vector<4x1024xf32>
    %95 = arith.addf %94, %93 : vector<4x1024xf32>
    %96 = vector.broadcast %35 : vector<1x1024xf32> to vector<4x1024xf32>
    %97 = vector.broadcast %81 : vector<4x1xf32> to vector<4x1024xf32>
    %98 = arith.mulf %96, %97 : vector<4x1024xf32>
    %99 = arith.addf %95, %98 : vector<4x1024xf32>
    %cst_21 = arith.constant 5.000000e-01 : f32
    %100 = vector.broadcast %cst_21 : f32 to vector<4x1024xf32>
    %101 = arith.mulf %99, %100 : vector<4x1024xf32>
    %cst_22 = arith.constant 1.410000e+01 : f32
    %102 = vector.broadcast %cst_22 : f32 to vector<4x1024xf32>
    %103 = math.powf %101, %102 : vector<4x1024xf32>
    %104 = vector.extract_strided_slice %103 {offsets = [0, 0], sizes = [1, 1024], strides = [1, 1]} : vector<4x1024xf32> to vector<1x1024xf32>
    %105 = vector.broadcast %104 : vector<1x1024xf32> to vector<8x1024xf32>
    %106 = arith.mulf %105, %90 : vector<8x1024xf32>
    %c0_23 = arith.constant 0 : index
    %c0_24 = arith.constant 0 : index
    %c0_25 = arith.constant 0 : index
    %107 = vector.load %arg2[%c0_23, %c0_24, %c0_25] : memref<4x8x1024xf32, #tpu.memory_space<vmem>>, vector<1x8x1024xf32>
    %108 = vector.shape_cast %107 : vector<1x8x1024xf32> to vector<8x1024xf32>
    %109 = vector.shape_cast %106 : vector<8x1024xf32> to vector<1x8x1024xf32>
    tpu.vector_store %arg2[%c0_23, %c0_24, %c0_25], %109 {strides = array<i32>} : memref<4x8x1024xf32, #tpu.memory_space<vmem>>, vector<1x8x1024xf32>,
    %110 = vector.extract_strided_slice %103 {offsets = [1, 0], sizes = [1, 1024], strides = [1, 1]} : vector<4x1024xf32> to vector<1x1024xf32>
    %111 = vector.broadcast %110 : vector<1x1024xf32> to vector<8x1024xf32>
    %112 = arith.mulf %111, %90 : vector<8x1024xf32>
    %c1 = arith.constant 1 : index
    %c0_26 = arith.constant 0 : index
    %c0_27 = arith.constant 0 : index
    %113 = vector.load %arg2[%c1, %c0_26, %c0_27] : memref<4x8x1024xf32, #tpu.memory_space<vmem>>, vector<1x8x1024xf32>
    %114 = vector.shape_cast %113 : vector<1x8x1024xf32> to vector<8x1024xf32>
    %115 = vector.shape_cast %112 : vector<8x1024xf32> to vector<1x8x1024xf32>
    tpu.vector_store %arg2[%c1, %c0_26, %c0_27], %115 {strides = array<i32>} : memref<4x8x1024xf32, #tpu.memory_space<vmem>>, vector<1x8x1024xf32>,
    %116 = vector.extract_strided_slice %103 {offsets = [2, 0], sizes = [1, 1024], strides = [1, 1]} : vector<4x1024xf32> to vector<1x1024xf32>
    %117 = vector.broadcast %116 : vector<1x1024xf32> to vector<8x1024xf32>
    %118 = arith.mulf %117, %90 : vector<8x1024xf32>
    %c2 = arith.constant 2 : index
    %c0_28 = arith.constant 0 : index
    %c0_29 = arith.constant 0 : index
    %119 = vector.load %arg2[%c2, %c0_28, %c0_29] : memref<4x8x1024xf32, #tpu.memory_space<vmem>>, vector<1x8x1024xf32>
    %120 = vector.shape_cast %119 : vector<1x8x1024xf32> to vector<8x1024xf32>
    %121 = vector.shape_cast %118 : vector<8x1024xf32> to vector<1x8x1024xf32>
    tpu.vector_store %arg2[%c2, %c0_28, %c0_29], %121 {strides = array<i32>} : memref<4x8x1024xf32, #tpu.memory_space<vmem>>, vector<1x8x1024xf32>,
    %122 = vector.extract_strided_slice %103 {offsets = [3, 0], sizes = [1, 1024], strides = [1, 1]} : vector<4x1024xf32> to vector<1x1024xf32>
    %123 = vector.broadcast %122 : vector<1x1024xf32> to vector<8x1024xf32>
    %124 = arith.mulf %123, %90 : vector<8x1024xf32>
    %c3 = arith.constant 3 : index
    %c0_30 = arith.constant 0 : index
    %c0_31 = arith.constant 0 : index
    %125 = vector.load %arg2[%c3, %c0_30, %c0_31] : memref<4x8x1024xf32, #tpu.memory_space<vmem>>, vector<1x8x1024xf32>
    %126 = vector.shape_cast %125 : vector<1x8x1024xf32> to vector<8x1024xf32>
    %127 = vector.shape_cast %124 : vector<8x1024xf32> to vector<1x8x1024xf32>
    tpu.vector_store %arg2[%c3, %c0_30, %c0_31], %127 {strides = array<i32>} : memref<4x8x1024xf32, #tpu.memory_space<vmem>>, vector<1x8x1024xf32>,
    return
  }
  func.func @transform_0(%arg0: i32) -> (i32, i32) {
    %c0_i32 = arith.constant 0 : i32
    %c0_i32_0 = arith.constant 0 : i32
    return %c0_i32, %arg0 : i32, i32
  }
  func.func @transform_1(%arg0: i32) -> (i32, i32, i32) {
    %c0_i32 = arith.constant 0 : i32
    %c0_i32_0 = arith.constant 0 : i32
    %c0_i32_1 = arith.constant 0 : i32
    return %c0_i32, %c0_i32_0, %arg0 : i32, i32, i32
  }
}

</mosaic_0001>

<llo_original>
// kernel: tpu_custom_call.1
$region0: #{tpu_custom_call.1}
  #allocation0 [shape = 'u32[]', space=smem, size = 0x4, offset = 0x4, fixed_abs, tag = 'smem constant byte address 0x4 - core index']
  #allocation1 [shape = 'u32[144,128]{1,0:T(1,128)}', space=vmem, size = 0x12000, scoped, tag = 'internal scratch']
  %s0 = inlined_call_operand.hbm [shape: f32[6,4096], index: 0, kind: input, shape index: {}]
  %s1 = inlined_call_operand.hbm [shape: f32[4,8,4096], index: 1, kind: output, shape index: {}]
  %s2 = sld [smem:[#allocation0]]
  $region41: #{tpu_custom_call.1} parent=0
    _
  %s4 = ssub.s32 1, %s2
  %s5 = scalar_select 0, %s4, %s2
  $region1: #{tpu_custom_call.1} parent=0
    #allocation2 [shape = 'u8[65536]{0}', space=vmem, size = 0x10000, scoped, tag = 'input window, operand 0']
    #allocation3 [shape = 's32[2]{0}', space=sflag, size = 0x8, scoped, tag = 'scoped memory for tpu_custom_call.1']
    #allocation4 [shape = 's32[2]{0}', space=sflag, size = 0x8, scoped, tag = 'scoped memory for tpu_custom_call.1']
    #allocation5 [shape = 'u8[262144]{0}', space=vmem, size = 0x40000, scoped, tag = 'output window, operand 0']
    %6 = vsyncpa [#allocation3], 0
    %s7 = scalar_lea.sflag [#allocation3], 1
    %8 = vsyncpa %s7, 0
    %9 = vsyncpa [#allocation4], 0
    %s10 = scalar_lea.sflag [#allocation4], 1
    %11 = vsyncpa %s10, 0
    loop: start=0, step=1, limit=6
    $region2: #{tpu_custom_call.1} parent=1 // loop_pre_header
      _
    $region3: #{tpu_custom_call.1} parent=1 // loop_header
      %s13 = sphi 0, %s17
      %p14 = scmp.ge.s32.totalorder %s13, 6
      %s23 = sphi 0, %s25
      %s26 = sphi 0, %s23
      %s27 = sphi 0, %s26
      %s43 = sphi 0, %s27
      %s49 = sphi 0, %s51
      %s52 = sphi 0, %s49
      %s53 = sphi 0, %s52
      %s69 = sphi 0, %s53
    $region4: #{tpu_custom_call.1} parent=1 // loop_header_branch
      %16 = sbr.rel (%p14) target = $region8
    $region5: #{tpu_custom_call.1} parent=1 // loop_body
      %s18 = ssub.s32 %s13, 1
      %s19 = ssub.s32 %s13, 2
      %s20 = sadd.s32 %s13, 1
      %s21 = ssub.s32 %s13, %s20
      %p22 = scmp.eq.s32.totalorder %s21, 0
      %s24 = sadd.s32 %s23, 1
      %s25 = scalar_select %p22, %s23, %s24
      %p28 = pneg %p22
      %p29 = scmp.eq.s32.totalorder %s13, 3
      %p30 = por %p28, %p29
      %p31 = scmp.ne.s32.totalorder %s23, %s26
      %p32 = scmp.eq.s32.totalorder %s13, 0
      %p33 = por %p31, %p32
      %p34 = scmp.ne.s32.totalorder %s23, %s26
      %p35 = scmp.eq.s32.totalorder %s18, 3
      %p36 = por %p34, %p35
      %p37 = scmp.ne.s32.totalorder %s26, %s27
      %p38 = scmp.eq.s32.totalorder %s18, 0
      %p39 = por %p37, %p38
      %p40 = scmp.ne.s32.totalorder %s26, %s27
      %p41 = scmp.eq.s32.totalorder %s19, 3
      %p42 = por %p40, %p41
      %p44 = scmp.ne.s32.totalorder %s27, %s43
      %p45 = scmp.eq.s32.totalorder %s19, 0
      %p46 = por %p44, %p45
      %s47 = ssub.s32 %s13, %s20
      %p48 = scmp.eq.s32.totalorder %s47, 0
      %s50 = sadd.s32 %s49, 1
      %s51 = scalar_select %p48, %s49, %s50
      %p54 = pneg %p48
      %p55 = scmp.eq.s32.totalorder %s13, 3
      %p56 = por %p54, %p55
      %p57 = scmp.ne.s32.totalorder %s49, %s52
      %p58 = scmp.eq.s32.totalorder %s13, 0
      %p59 = por %p57, %p58
      %p60 = scmp.ne.s32.totalorder %s49, %s52
      %p61 = scmp.eq.s32.totalorder %s18, 3
      %p62 = por %p60, %p61
      %p63 = scmp.ne.s32.totalorder %s52, %s53
      %p64 = scmp.eq.s32.totalorder %s18, 0
      %p65 = por %p63, %p64
      %p66 = scmp.ne.s32.totalorder %s52, %s53
      %p67 = scmp.eq.s32.totalorder %s19, 3
      %p68 = por %p66, %p67
      %p70 = scmp.ne.s32.totalorder %s53, %s69
      %p71 = scmp.eq.s32.totalorder %s19, 0
      %p72 = por %p70, %p71
      %p73 = scmp.le.s32.totalorder 1, %s13
      %p74 = scmp.lt.s32.totalorder %s13, 5
      %p75 = pnand %p73, %p74
      %p76 = pneg %p75
      // Predicated region
      $region9: #{tpu_custom_call.1} parent=5 // pred_check
        _
      $region10: #{tpu_custom_call.1} parent=5 // pred_check_branch
        %78 = sbr.rel (%p75) target = $region12
      $region11: #{tpu_custom_call.1} parent=5 // pred_region
        %s79 = ssub.s32 %s13, 1
      $region12: #{tpu_custom_call.1} parent=5 // pred_fallthru
        _
      %p80 = scmp.lt.s32.totalorder %s13, 4
      // Predicated region
      $region13: #{tpu_custom_call.1} parent=5 // pred_check
        %p81 = pneg %p80
      $region14: #{tpu_custom_call.1} parent=5 // pred_check_branch
        %83 = sbr.rel (%p81) target = $region16
      $region15: #{tpu_custom_call.1} parent=5 // pred_region
        // Predicated region
        $region17: #{tpu_custom_call.1} parent=15 // pred_check
          %p84 = pneg %p33
        $region18: #{tpu_custom_call.1} parent=15 // pred_check_branch
          %86 = sbr.rel (%p84) target = $region20
        $region19: #{tpu_custom_call.1} parent=15 // pred_region
          %s87 = sand.u32 %s23, 1
          %s88 = scalar_lea.sflag [#allocation3], %s87
          %s89 = sand.u32 %s23, 1
          %s90 = smul.addr %s89, 64
          %s91 = scalar_lea.vmem [#allocation2], %s90
          %s92 = smul.u32 8, %s13
          %s94 = ssub.s32 1024, 1024
          %95 = vsyncadd %s88, %s94
          %s96 = smul.addr %s92, 128
          %s97 = scalar_lea.hbm %s0, %s96
          %s99 = sshll.u32 %s91, 4
          %s100 = int_to_ptr.vmem [resolvable:$true] %s99
          %102 = dma.hbm_to_vmem [thread:$0]  %s97, 1024, %s100, %s88
        $region20: #{tpu_custom_call.1} parent=15 // pred_fallthru
          _
      $region16: #{tpu_custom_call.1} parent=5 // pred_fallthru
        _
      %p103 = scmp.le.s32.totalorder 1, %s13
      %p104 = scmp.lt.s32.totalorder %s13, 5
      %p105 = pnand %p103, %p104
      %p106 = pneg %p105
      // Predicated region
      $region21: #{tpu_custom_call.1} parent=5 // pred_check
        _
      $region22: #{tpu_custom_call.1} parent=5 // pred_check_branch
        %108 = sbr.rel (%p105) target = $region24
      $region23: #{tpu_custom_call.1} parent=5 // pred_region
        %s109 = ssub.s32 %s13, 1
        %s110 = sand.u32 %s26, 1
        %s111 = scalar_lea.sflag [#allocation3], %s110
        %s112 = sand.u32 %s26, 1
        %s113 = smul.addr %s112, 64
        %s114 = scalar_lea.vmem [#allocation2], %s113
        // Predicated region
        $region25: #{tpu_custom_call.1} parent=23 // pred_check
          %p115 = pneg %p39
        $region26: #{tpu_custom_call.1} parent=23 // pred_check_branch
          %117 = sbr.rel (%p115) target = $region28
        $region27: #{tpu_custom_call.1} parent=23 // pred_region
          %118 = dma.done %s111, 1024
        $region28: #{tpu_custom_call.1} parent=23 // pred_fallthru
          _
        %s119 = sand.u32 %s26, 1
        %s120 = scalar_lea.sflag [#allocation3], %s119
        %s121 = sand.u32 %s26, 1
        %s122 = smul.addr %s121, 64
        %s123 = scalar_lea.vmem [#allocation2], %s122
        %p124 = pneg %p39
        %p125 = pneg %p36
        %p126 = pneg %p65
        %p127 = pneg %p62
        %s128 = sand.u32 %s52, 1
        %s129 = scalar_lea.sflag [#allocation4], %s128
        %s130 = sand.u32 %s52, 1
        %s131 = smul.addr %s130, 256
        %s132 = scalar_lea.vmem [#allocation5], %s131
        %s133 = smul.u32 8, %s18
        %s134 = smul.u32 8, %s18
        %v135 = vld [vmem:[%s114] sm:$0x3f]
        %v136 = vld [vmem:[%s114 + $0x8] sm:$0x3f]
        %v137 = vld [vmem:[%s114 + $0x10] sm:$0x3f]
        %v138 = vld [vmem:[%s114 + $0x18] sm:$0x3f]
        %v139 = vld [vmem:[%s114 + $0x20] sm:$0x3f]
        %v140 = vld [vmem:[%s114 + $0x28] sm:$0x3f]
        %v141 = vld [vmem:[%s114 + $0x30] sm:$0x3f]
        %v142 = vld [vmem:[%s114 + $0x38] sm:$0x3f]
        %v143 = vmul.f32 %v135, %v135
        %v144 = vmul.f32 %v136, %v136
        %v145 = vmul.f32 %v137, %v137
        %v146 = vmul.f32 %v138, %v138
        %v147 = vmul.f32 %v139, %v139
        %v148 = vmul.f32 %v140, %v140
        %v149 = vmul.f32 %v141, %v141
        %v150 = vmul.f32 %v142, %v142
        %v159 = vrot.slane %v143, 1
        %v160 = vrot.slane %v144, 1
        %v161 = vrot.slane %v145, 1
        %v162 = vrot.slane %v146, 1
        %v163 = vrot.slane %v147, 1
        %v164 = vrot.slane %v148, 1
        %v165 = vrot.slane %v149, 1
        %v166 = vrot.slane %v150, 1
        %v175 = vadd.f32 %v143, %v159
        %v176 = vadd.f32 %v144, %v160
        %v177 = vadd.f32 %v145, %v161
        %v178 = vadd.f32 %v146, %v162
        %v179 = vadd.f32 %v147, %v163
        %v180 = vadd.f32 %v148, %v164
        %v181 = vadd.f32 %v149, %v165
        %v182 = vadd.f32 %v150, %v166
        %v183 = vrot.slane %v143, 2
        %v184 = vrot.slane %v144, 2
        %v185 = vrot.slane %v145, 2
        %v186 = vrot.slane %v146, 2
        %v187 = vrot.slane %v147, 2
        %v188 = vrot.slane %v148, 2
        %v189 = vrot.slane %v149, 2
        %v190 = vrot.slane %v150, 2
        %v199 = vadd.f32 %v175, %v183
        %v200 = vadd.f32 %v176, %v184
        %v201 = vadd.f32 %v177, %v185
        %v202 = vadd.f32 %v178, %v186
        %v203 = vadd.f32 %v179, %v187
        %v204 = vadd.f32 %v180, %v188
        %v205 = vadd.f32 %v181, %v189
        %v206 = vadd.f32 %v182, %v190
        %v207 = vrsqrt.pop %v199
        %v208 = vmul.f32 %v199, %v207
        %vm209 = vcmp.eq.f32.partialorder %v199, inf
        %v210 = vsel %vm209, %v199, %v208
        %vm211 = vcmp.eq.f32.partialorder %v199, 0.0
        %v212 = vand.u32 %v199, 2147483648
        %v213 = vsel %vm211, %v212, %v210
        %v214 = vrsqrt.pop %v200
        %v215 = vmul.f32 %v200, %v214
        %vm216 = vcmp.eq.f32.partialorder %v200, inf
        %v217 = vsel %vm216, %v200, %v215
        %vm218 = vcmp.eq.f32.partialorder %v200, 0.0
        %v219 = vand.u32 %v200, 2147483648
        %v220 = vsel %vm218, %v219, %v217
        %v221 = vrsqrt.pop %v201
        %v222 = vmul.f32 %v201, %v221
        %vm223 = vcmp.eq.f32.partialorder %v201, inf
        %v224 = vsel %vm223, %v201, %v222
        %vm225 = vcmp.eq.f32.partialorder %v201, 0.0
        %v226 = vand.u32 %v201, 2147483648
        %v227 = vsel %vm225, %v226, %v224
        %v228 = vrsqrt.pop %v202
        %v229 = vmul.f32 %v202, %v228
        %vm230 = vcmp.eq.f32.partialorder %v202, inf
        %v231 = vsel %vm230, %v202, %v229
        %vm232 = vcmp.eq.f32.partialorder %v202, 0.0
        %v233 = vand.u32 %v202, 2147483648
        %v234 = vsel %vm232, %v233, %v231
        %v235 = vrsqrt.pop %v203
        %v236 = vmul.f32 %v203, %v235
        %vm237 = vcmp.eq.f32.partialorder %v203, inf
        %v238 = vsel %vm237, %v203, %v236
        %vm239 = vcmp.eq.f32.partialorder %v203, 0.0
        %v240 = vand.u32 %v203, 2147483648
        %v241 = vsel %vm239, %v240, %v238
        %v242 = vrsqrt.pop %v204
        %v243 = vmul.f32 %v204, %v242
        %vm244 = vcmp.eq.f32.partialorder %v204, inf
        %v245 = vsel %vm244, %v204, %v243
        %vm246 = vcmp.eq.f32.partialorder %v204, 0.0
        %v247 = vand.u32 %v204, 2147483648
        %v248 = vsel %vm246, %v247, %v245
        %v249 = vrsqrt.pop %v205
        %v250 = vmul.f32 %v205, %v249
        %vm251 = vcmp.eq.f32.partialorder %v205, inf
        %v252 = vsel %vm251, %v205, %v250
        %vm253 = vcmp.eq.f32.partialorder %v205, 0.0
        %v254 = vand.u32 %v205, 2147483648
        %v255 = vsel %vm253, %v254, %v252
        %v256 = vrsqrt.pop %v206
        %v257 = vmul.f32 %v206, %v256
        %vm258 = vcmp.eq.f32.partialorder %v206, inf
        %v259 = vsel %vm258, %v206, %v257
        %vm260 = vcmp.eq.f32.partialorder %v206, 0.0
        %v261 = vand.u32 %v206, 2147483648
        %v262 = vsel %vm260, %v261, %v259
        %v271 = vrot.slane %v135, 3
        %v272 = vrot.slane %v136, 3
        %v273 = vrot.slane %v137, 3
        %v274 = vrot.slane %v138, 3
        %v275 = vrot.slane %v139, 3
        %v276 = vrot.slane %v140, 3
        %v277 = vrot.slane %v141, 3
        %v278 = vrot.slane %v142, 3
        %v287 = vmul.f32 %v135, %v271
        %v288 = vmul.f32 %v136, %v272
        %v289 = vmul.f32 %v137, %v273
        %v290 = vmul.f32 %v138, %v274
        %v291 = vmul.f32 %v139, %v275
        %v292 = vmul.f32 %v140, %v276
        %v293 = vmul.f32 %v141, %v277
        %v294 = vmul.f32 %v142, %v278
        %v303 = vrot.slane %v287, 1
        %v304 = vrot.slane %v288, 1
        %v305 = vrot.slane %v289, 1
        %v306 = vrot.slane %v290, 1
        %v307 = vrot.slane %v291, 1
        %v308 = vrot.slane %v292, 1
        %v309 = vrot.slane %v293, 1
        %v310 = vrot.slane %v294, 1
        %v319 = vadd.f32 %v287, %v303
        %v320 = vadd.f32 %v288, %v304
        %v321 = vadd.f32 %v289, %v305
        %v322 = vadd.f32 %v290, %v306
        %v323 = vadd.f32 %v291, %v307
        %v324 = vadd.f32 %v292, %v308
        %v325 = vadd.f32 %v293, %v309
        %v326 = vadd.f32 %v294, %v310
        %v327 = vrot.slane %v287, 2
        %v328 = vrot.slane %v288, 2
        %v329 = vrot.slane %v289, 2
        %v330 = vrot.slane %v290, 2
        %v331 = vrot.slane %v291, 2
        %v332 = vrot.slane %v292, 2
        %v333 = vrot.slane %v293, 2
        %v334 = vrot.slane %v294, 2
        %v343 = vadd.f32 %v319, %v327
        %v344 = vadd.f32 %v320, %v328
        %v345 = vadd.f32 %v321, %v329
        %v346 = vadd.f32 %v322, %v330
        %v347 = vadd.f32 %v323, %v331
        %v348 = vadd.f32 %v324, %v332
        %v349 = vadd.f32 %v325, %v333
        %v350 = vadd.f32 %v326, %v334
        %v351 = vmul.f32 %v343, 0.95
        %v352 = vmul.f32 %v344, 0.95
        %v353 = vmul.f32 %v345, 0.95
        %v354 = vmul.f32 %v346, 0.95
        %v355 = vmul.f32 %v347, 0.95
        %v356 = vmul.f32 %v348, 0.95
        %v357 = vmul.f32 %v349, 0.95
        %v358 = vmul.f32 %v350, 0.95
        %v367 = vrot.slane %v213, 3
        %v368 = vrot.slane %v220, 3
        %v369 = vrot.slane %v227, 3
        %v370 = vrot.slane %v234, 3
        %v371 = vrot.slane %v241, 3
        %v372 = vrot.slane %v248, 3
        %v373 = vrot.slane %v255, 3
        %v374 = vrot.slane %v262, 3
        %v383 = vmul.f32 %v213, %v367
        %v384 = vmul.f32 %v220, %v368
        %v385 = vmul.f32 %v227, %v369
        %v386 = vmul.f32 %v234, %v370
        %v387 = vmul.f32 %v241, %v371
        %v388 = vmul.f32 %v248, %v372
        %v389 = vmul.f32 %v255, %v373
        %v390 = vmul.f32 %v262, %v374
        %v391 = vmax.f32 %v383, 1e-08
        %v392 = vmax.f32 %v384, 1e-08
        %v393 = vmax.f32 %v385, 1e-08
        %v394 = vmax.f32 %v386, 1e-08
        %v395 = vmax.f32 %v387, 1e-08
        %v396 = vmax.f32 %v388, 1e-08
        %v397 = vmax.f32 %v389, 1e-08
        %v398 = vmax.f32 %v390, 1e-08
        %v399 = vrcp.pop %v391
        %v400 = vmul.f32 %v351, %v399
        %v401 = vrcp.pop %v392
        %v402 = vmul.f32 %v352, %v401
        %v403 = vrcp.pop %v393
        %v404 = vmul.f32 %v353, %v403
        %v405 = vrcp.pop %v394
        %v406 = vmul.f32 %v354, %v405
        %v407 = vrcp.pop %v395
        %v408 = vmul.f32 %v355, %v407
        %v409 = vrcp.pop %v396
        %v410 = vmul.f32 %v356, %v409
        %v411 = vrcp.pop %v397
        %v412 = vmul.f32 %v357, %v411
        %v413 = vrcp.pop %v398
        %v414 = vmul.f32 %v358, %v413
        %v415 = vmul.f32 %v400, %v400
        %v416 = vmul.f32 %v402, %v402
        %v417 = vmul.f32 %v404, %v404
        %v418 = vmul.f32 %v406, %v406
        %v419 = vmul.f32 %v408, %v408
        %v420 = vmul.f32 %v410, %v410
        %v421 = vmul.f32 %v412, %v412
        %v422 = vmul.f32 %v414, %v414
        %v423 = vsub.f32 1.0, %v415
        %v424 = vsub.f32 1.0, %v416
        %v425 = vsub.f32 1.0, %v417
        %v426 = vsub.f32 1.0, %v418
        %v427 = vsub.f32 1.0, %v419
        %v428 = vsub.f32 1.0, %v420
        %v429 = vsub.f32 1.0, %v421
        %v430 = vsub.f32 1.0, %v422
        %v431 = vmax.f32 %v423, 0.0
        %v432 = vmax.f32 %v424, 0.0
        %v433 = vmax.f32 %v425, 0.0
        %v434 = vmax.f32 %v426, 0.0
        %v435 = vmax.f32 %v427, 0.0
        %v436 = vmax.f32 %v428, 0.0
        %v437 = vmax.f32 %v429, 0.0
        %v438 = vmax.f32 %v430, 0.0
        %v439 = vrsqrt.pop %v431
        %v440 = vmul.f32 %v431, %v439
        %vm441 = vcmp.eq.f32.partialorder %v431, inf
        %v442 = vsel %vm441, %v431, %v440
        %vm443 = vcmp.eq.f32.partialorder %v431, 0.0
        %v444 = vand.u32 %v431, 2147483648
        %v445 = vsel %vm443, %v444, %v442
        %v446 = vrsqrt.pop %v432
        %v447 = vmul.f32 %v432, %v446
        %vm448 = vcmp.eq.f32.partialorder %v432, inf
        %v449 = vsel %vm448, %v432, %v447
        %vm450 = vcmp.eq.f32.partialorder %v432, 0.0
        %v451 = vand.u32 %v432, 2147483648
        %v452 = vsel %vm450, %v451, %v449
        %v453 = vrsqrt.pop %v433
        %v454 = vmul.f32 %v433, %v453
        %vm455 = vcmp.eq.f32.partialorder %v433, inf
        %v456 = vsel %vm455, %v433, %v454
        %vm457 = vcmp.eq.f32.partialorder %v433, 0.0
        %v458 = vand.u32 %v433, 2147483648
        %v459 = vsel %vm457, %v458, %v456
        %v460 = vrsqrt.pop %v434
        %v461 = vmul.f32 %v434, %v460
        %vm462 = vcmp.eq.f32.partialorder %v434, inf
        %v463 = vsel %vm462, %v434, %v461
        %vm464 = vcmp.eq.f32.partialorder %v434, 0.0
        %v465 = vand.u32 %v434, 2147483648
        %v466 = vsel %vm464, %v465, %v463
        %v467 = vrsqrt.pop %v435
        %v468 = vmul.f32 %v435, %v467
        %vm469 = vcmp.eq.f32.partialorder %v435, inf
        %v470 = vsel %vm469, %v435, %v468
        %vm471 = vcmp.eq.f32.partialorder %v435, 0.0
        %v472 = vand.u32 %v435, 2147483648
        %v473 = vsel %vm471, %v472, %v470
        %v474 = vrsqrt.pop %v436
        %v475 = vmul.f32 %v436, %v474
        %vm476 = vcmp.eq.f32.partialorder %v436, inf
        %v477 = vsel %vm476, %v436, %v475
        %vm478 = vcmp.eq.f32.partialorder %v436, 0.0
        %v479 = vand.u32 %v436, 2147483648
        %v480 = vsel %vm478, %v479, %v477
        %v481 = vrsqrt.pop %v437
        %v482 = vmul.f32 %v437, %v481
        %vm483 = vcmp.eq.f32.partialorder %v437, inf
        %v484 = vsel %vm483, %v437, %v482
        %vm485 = vcmp.eq.f32.partialorder %v437, 0.0
        %v486 = vand.u32 %v437, 2147483648
        %v487 = vsel %vm485, %v486, %v484
        %v488 = vrsqrt.pop %v438
        %v489 = vmul.f32 %v438, %v488
        %vm490 = vcmp.eq.f32.partialorder %v438, inf
        %v491 = vsel %vm490, %v438, %v489
        %vm492 = vcmp.eq.f32.partialorder %v438, 0.0
        %v493 = vand.u32 %v438, 2147483648
        %v494 = vsel %vm492, %v493, %v491
        %v495 = vmul.f32 %v213, 8.975979
        %v496 = vmul.f32 %v220, 8.975979
        %v497 = vmul.f32 %v227, 8.975979
        %v498 = vmul.f32 %v234, 8.975979
        %v499 = vmul.f32 %v241, 8.975979
        %v500 = vmul.f32 %v248, 8.975979
        %v501 = vmul.f32 %v255, 8.975979
        %v502 = vmul.f32 %v262, 8.975979
        %v503 = vand.u32 2147483647, %v495
        %vm504 = vcmp.le.f32.partialorder %v503, 0.7853982
        %vm505 = vcmp.lt.s32.totalorder %v495, 0
        %v506 = vand.u32 %v495, 2139095040
        %v507 = vshrl.u32 %v506, 23
        %v508 = vsub.s32 %v507, 127
        %v509 = vand.u32 2147483647, %v495
        %v510 = vand.u32 %v509, 8388607
        %v511 = vor.u32 %v510, 8388608
        %v512 = vsub.s32 0, %v511
        %v513 = vadd.s32 %v508, 1
        %vm514 = vcmp.gt.s32.totalorder %v513, 0
        %v515 = vsel %vm514, %v513, 0
        %v516 = vshrl.u32 %v515, 5
        %v517 = vand.u32 %v515, 31
        %v518 = vsub.s32 32, %v517
        %v519 = vshrl.u32 683565275, %v518
        %v520 = vshll.u32 683565275, %v517
        %v521 = vshrl.u32 2475754826, %v518
        %v522 = vor.u32 %v520, %v521
        %v523 = vshll.u32 2475754826, %v517
        %v524 = vshrl.u32 2131351028, %v518
        %v525 = vor.u32 %v523, %v524
        %v526 = vshll.u32 2131351028, %v517
        %v527 = vshrl.u32 2102212464, %v518
        %v528 = vor.u32 %v526, %v527
        %v529 = vshll.u32 2102212464, %v517
        %v530 = vshrl.u32 920167782, %v518
        %v531 = vor.u32 %v529, %v530
        %v532 = vshll.u32 920167782, %v517
        %v533 = vshrl.u32 1326507024, %v518
        %v534 = vor.u32 %v532, %v533
        %vm535 = vcmp.lt.s32.totalorder %v516, 1
        %vm536 = vcmp.lt.s32.totalorder %v516, 2
        %vm537 = vcmp.lt.s32.totalorder %v516, 3
        %vm538 = vcmp.lt.s32.totalorder %v516, 4
        %v539 = vsel %vm535, %v519, %v522
        %v540 = vsel %vm538, %v528, 2102212464
        %v541 = vsel %vm537, %v525, %v540
        %v542 = vsel %vm536, %v539, %v541
        %v543 = vsel %vm535, %v522, %v525
        %v544 = vsel %vm538, %v531, 920167782
        %v545 = vsel %vm537, %v528, %v544
        %v546 = vsel %vm536, %v543, %v545
        %v547 = vsel %vm535, %v525, %v528
        %v548 = vsel %vm538, %v534, 1326507024
        %v549 = vsel %vm537, %v531, %v548
        %v550 = vsel %vm536, %v547, %v549
        %v551 = vshll.u32 %v511, 8
        %v552 = vmul.u32.u64.compose %v551, %v550
        %v553 = vextract.low.u32 %v552
        %v554 = vextract.high.u32 %v552
        %v555 = vmul.u32.u64.compose %v551, %v546
        %v556 = vextract.low.u32 %v555
        %v557 = vextract.high.u32 %v555
        %v558 = vmul.u32 %v551, %v542
        %v559 = vadd.s32 %v554, %v556
        %vm560 = vc.u32 %v554, %v556
        %v561 = vadd.s32 %v557, 1
        %v562 = vsel %vm560, %v561, %v557
        %v563 = vadd.s32 %v558, %v562
        %v564 = vadd.s32 %v563, 536870912
        %v565 = vshrl.u32 %v564, 30
        %v566 = vshll.u32 %v565, 30
        %v567 = vsub.s32 %v563, %v566
        %vm568 = vcmp.lt.s32.totalorder %v567, 0
        %v569 = vsub.s32 0, %v567
        %v570 = vsel %vm568, %v569, %v567
        %v571 = vclz %v570
        %v572 = vsub.s32 %v571, 2
        %vm573 = vcmp.gt.s32.totalorder 0, %v572
        %v574 = vsel %vm573, 0, %v572
        %v575 = vsub.s32 32, %v574
        %v576 = vshll.u32 %v567, %v574
        %v577 = vshrl.u32 %v559, %v575
        %v578 = vor.u32 %v576, %v577
        %v579 = vsub.s32 4294967266, %v574
        %v580 = vadd.s32 %v579, 127
        %v581 = vshll.u32 %v580, 23
        %v582 = vor.u32 4788187, %v581
        %v583 = vand.u32 2147483647, %v582
        %v585 = vcvt.s32.f32 %v578
        %v586 = vmul.f32 %v585, %v583
        %v587 = vxor.u32 %v586, 2147483648
        %v588 = vsel %vm505, %v587, %v586
        %v589 = vsub.s32 4, %v565
        %v590 = vsel %vm505, %v589, %v565
        %v591 = vsel %vm504, %v495, %v588
        %v592 = vsel %vm504, 0, %v590
        %v593 = vcosq.f32.pop %v591
        %v594 = vsinq.f32.pop %v591
        %vm595 = vweird.f32 %v495
        %v596 = vand.u32 %v592, 3
        %vm597 = vcmp.lt.s32.totalorder %v596, 2
        %vm598 = vcmp.eq.s32.totalorder %v596, 0
        %v599 = vxor.u32 %v594, 2147483648
        %v600 = vsel %vm598, %v593, %v599
        %vm601 = vcmp.eq.s32.totalorder %v596, 2
        %v602 = vxor.u32 %v593, 2147483648
        %v603 = vsel %vm601, %v602, %v594
        %v604 = vsel %vm597, %v600, %v603
        %v605 = vsel %vm595, nan, %v604
        %v606 = vand.u32 2147483647, %v496
        %vm607 = vcmp.le.f32.partialorder %v606, 0.7853982
        %vm608 = vcmp.lt.s32.totalorder %v496, 0
        %v609 = vand.u32 %v496, 2139095040
        %v610 = vshrl.u32 %v609, 23
        %v611 = vsub.s32 %v610, 127
        %v612 = vand.u32 2147483647, %v496
        %v613 = vand.u32 %v612, 8388607
        %v614 = vor.u32 %v613, 8388608
        %v615 = vsub.s32 0, %v614
        %v616 = vadd.s32 %v611, 1
        %vm617 = vcmp.gt.s32.totalorder %v616, 0
        %v618 = vsel %vm617, %v616, 0
        %v619 = vshrl.u32 %v618, 5
        %v620 = vand.u32 %v618, 31
        %v621 = vsub.s32 32, %v620
        %v622 = vshrl.u32 683565275, %v621
        %v623 = vshll.u32 683565275, %v620
        %v624 = vshrl.u32 2475754826, %v621
        %v625 = vor.u32 %v623, %v624
        %v626 = vshll.u32 2475754826, %v620
        %v627 = vshrl.u32 2131351028, %v621
        %v628 = vor.u32 %v626, %v627
        %v629 = vshll.u32 2131351028, %v620
        %v630 = vshrl.u32 2102212464, %v621
        %v631 = vor.u32 %v629, %v630
        %v632 = vshll.u32 2102212464, %v620
        %v633 = vshrl.u32 920167782, %v621
        %v634 = vor.u32 %v632, %v633
        %v635 = vshll.u32 920167782, %v620
        %v636 = vshrl.u32 1326507024, %v621
        %v637 = vor.u32 %v635, %v636
        %vm638 = vcmp.lt.s32.totalorder %v619, 1
        %vm639 = vcmp.lt.s32.totalorder %v619, 2
        %vm640 = vcmp.lt.s32.totalorder %v619, 3
        %vm641 = vcmp.lt.s32.totalorder %v619, 4
        %v642 = vsel %vm638, %v622, %v625
        %v643 = vsel %vm641, %v631, 2102212464
        %v644 = vsel %vm640, %v628, %v643
        %v645 = vsel %vm639, %v642, %v644
        %v646 = vsel %vm638, %v625, %v628
        %v647 = vsel %vm641, %v634, 920167782
        %v648 = vsel %vm640, %v631, %v647
        %v649 = vsel %vm639, %v646, %v648
        %v650 = vsel %vm638, %v628, %v631
        %v651 = vsel %vm641, %v637, 1326507024
        %v652 = vsel %vm640, %v634, %v651
        %v653 = vsel %vm639, %v650, %v652
        %v654 = vshll.u32 %v614, 8
        %v655 = vmul.u32.u64.compose %v654, %v653
        %v656 = vextract.low.u32 %v655
        %v657 = vextract.high.u32 %v655
        %v658 = vmul.u32.u64.compose %v654, %v649
        %v659 = vextract.low.u32 %v658
        %v660 = vextract.high.u32 %v658
        %v661 = vmul.u32 %v654, %v645
        %v662 = vadd.s32 %v657, %v659
        %vm663 = vc.u32 %v657, %v659
        %v664 = vadd.s32 %v660, 1
        %v665 = vsel %vm663, %v664, %v660
        %v666 = vadd.s32 %v661, %v665
        %v667 = vadd.s32 %v666, 536870912
        %v668 = vshrl.u32 %v667, 30
        %v669 = vshll.u32 %v668, 30
        %v670 = vsub.s32 %v666, %v669
        %vm671 = vcmp.lt.s32.totalorder %v670, 0
        %v672 = vsub.s32 0, %v670
        %v673 = vsel %vm671, %v672, %v670
        %v674 = vclz %v673
        %v675 = vsub.s32 %v674, 2
        %vm676 = vcmp.gt.s32.totalorder 0, %v675
        %v677 = vsel %vm676, 0, %v675
        %v678 = vsub.s32 32, %v677
        %v679 = vshll.u32 %v670, %v677
        %v680 = vshrl.u32 %v662, %v678
        %v681 = vor.u32 %v679, %v680
        %v682 = vsub.s32 4294967266, %v677
        %v683 = vadd.s32 %v682, 127
        %v684 = vshll.u32 %v683, 23
        %v685 = vor.u32 4788187, %v684
        %v686 = vand.u32 2147483647, %v685
        %v688 = vcvt.s32.f32 %v681
        %v689 = vmul.f32 %v688, %v686
        %v690 = vxor.u32 %v689, 2147483648
        %v691 = vsel %vm608, %v690, %v689
        %v692 = vsub.s32 4, %v668
        %v693 = vsel %vm608, %v692, %v668
        %v694 = vsel %vm607, %v496, %v691
        %v695 = vsel %vm607, 0, %v693
        %v696 = vcosq.f32.pop %v694
        %v697 = vsinq.f32.pop %v694
        %vm698 = vweird.f32 %v496
        %v699 = vand.u32 %v695, 3
        %vm700 = vcmp.lt.s32.totalorder %v699, 2
        %vm701 = vcmp.eq.s32.totalorder %v699, 0
        %v702 = vxor.u32 %v697, 2147483648
        %v703 = vsel %vm701, %v696, %v702
        %vm704 = vcmp.eq.s32.totalorder %v699, 2
        %v705 = vxor.u32 %v696, 2147483648
        %v706 = vsel %vm704, %v705, %v697
        %v707 = vsel %vm700, %v703, %v706
        %v708 = vsel %vm698, nan, %v707
        %v709 = vand.u32 2147483647, %v497
        %vm710 = vcmp.le.f32.partialorder %v709, 0.7853982
        %vm711 = vcmp.lt.s32.totalorder %v497, 0
        %v712 = vand.u32 %v497, 2139095040
        %v713 = vshrl.u32 %v712, 23
        %v714 = vsub.s32 %v713, 127
        %v715 = vand.u32 2147483647, %v497
        %v716 = vand.u32 %v715, 8388607
        %v717 = vor.u32 %v716, 8388608
        %v718 = vsub.s32 0, %v717
        %v719 = vadd.s32 %v714, 1
        %vm720 = vcmp.gt.s32.totalorder %v719, 0
        %v721 = vsel %vm720, %v719, 0
        %v722 = vshrl.u32 %v721, 5
        %v723 = vand.u32 %v721, 31
        %v724 = vsub.s32 32, %v723
        %v725 = vshrl.u32 683565275, %v724
        %v726 = vshll.u32 683565275, %v723
        %v727 = vshrl.u32 2475754826, %v724
        %v728 = vor.u32 %v726, %v727
        %v729 = vshll.u32 2475754826, %v723
        %v730 = vshrl.u32 2131351028, %v724
        %v731 = vor.u32 %v729, %v730
        %v732 = vshll.u32 2131351028, %v723
        %v733 = vshrl.u32 2102212464, %v724
        %v734 = vor.u32 %v732, %v733
        %v735 = vshll.u32 2102212464, %v723
        %v736 = vshrl.u32 920167782, %v724
        %v737 = vor.u32 %v735, %v736
        %v738 = vshll.u32 920167782, %v723
        %v739 = vshrl.u32 1326507024, %v724
        %v740 = vor.u32 %v738, %v739
        %vm741 = vcmp.lt.s32.totalorder %v722, 1
        %vm742 = vcmp.lt.s32.totalorder %v722, 2
        %vm743 = vcmp.lt.s32.totalorder %v722, 3
        %vm744 = vcmp.lt.s32.totalorder %v722, 4
        %v745 = vsel %vm741, %v725, %v728
        %v746 = vsel %vm744, %v734, 2102212464
        %v747 = vsel %vm743, %v731, %v746
        %v748 = vsel %vm742, %v745, %v747
        %v749 = vsel %vm741, %v728, %v731
        %v750 = vsel %vm744, %v737, 920167782
        %v751 = vsel %vm743, %v734, %v750
        %v752 = vsel %vm742, %v749, %v751
        %v753 = vsel %vm741, %v731, %v734
        %v754 = vsel %vm744, %v740, 1326507024
        %v755 = vsel %vm743, %v737, %v754
        %v756 = vsel %vm742, %v753, %v755
        %v757 = vshll.u32 %v717, 8
        %v758 = vmul.u32.u64.compose %v757, %v756
        %v759 = vextract.low.u32 %v758
        %v760 = vextract.high.u32 %v758
        %v761 = vmul.u32.u64.compose %v757, %v752
        %v762 = vextract.low.u32 %v761
        %v763 = vextract.high.u32 %v761
        %v764 = vmul.u32 %v757, %v748
        %v765 = vadd.s32 %v760, %v762
        %vm766 = vc.u32 %v760, %v762
        %v767 = vadd.s32 %v763, 1
        %v768 = vsel %vm766, %v767, %v763
        %v769 = vadd.s32 %v764, %v768
        %v770 = vadd.s32 %v769, 536870912
        %v771 = vshrl.u32 %v770, 30
        %v772 = vshll.u32 %v771, 30
        %v773 = vsub.s32 %v769, %v772
        %vm774 = vcmp.lt.s32.totalorder %v773, 0
        %v775 = vsub.s32 0, %v773
        %v776 = vsel %vm774, %v775, %v773
        %v777 = vclz %v776
        %v778 = vsub.s32 %v777, 2
        %vm779 = vcmp.gt.s32.totalorder 0, %v778
        %v780 = vsel %vm779, 0, %v778
        %v781 = vsub.s32 32, %v780
        %v782 = vshll.u32 %v773, %v780
        %v783 = vshrl.u32 %v765, %v781
        %v784 = vor.u32 %v782, %v783
        %v785 = vsub.s32 4294967266, %v780
        %v786 = vadd.s32 %v785, 127
        %v787 = vshll.u32 %v786, 23
        %v788 = vor.u32 4788187, %v787
        %v789 = vand.u32 2147483647, %v788
        %v791 = vcvt.s32.f32 %v784
        %v792 = vmul.f32 %v791, %v789
        %v793 = vxor.u32 %v792, 2147483648
        %v794 = vsel %vm711, %v793, %v792
        %v795 = vsub.s32 4, %v771
        %v796 = vsel %vm711, %v795, %v771
        %v797 = vsel %vm710, %v497, %v794
        %v798 = vsel %vm710, 0, %v796
        %v799 = vcosq.f32.pop %v797
        %v800 = vsinq.f32.pop %v797
        %vm801 = vweird.f32 %v497
        %v802 = vand.u32 %v798, 3
        %vm803 = vcmp.lt.s32.totalorder %v802, 2
        %vm804 = vcmp.eq.s32.totalorder %v802, 0
        %v805 = vxor.u32 %v800, 2147483648
        %v806 = vsel %vm804, %v799, %v805
        %vm807 = vcmp.eq.s32.totalorder %v802, 2
        %v808 = vxor.u32 %v799, 2147483648
        %v809 = vsel %vm807, %v808, %v800
        %v810 = vsel %vm803, %v806, %v809
        %v811 = vsel %vm801, nan, %v810
        %v812 = vand.u32 2147483647, %v498
        %vm813 = vcmp.le.f32.partialorder %v812, 0.7853982
        %vm814 = vcmp.lt.s32.totalorder %v498, 0
        %v815 = vand.u32 %v498, 2139095040
        %v816 = vshrl.u32 %v815, 23
        %v817 = vsub.s32 %v816, 127
        %v818 = vand.u32 2147483647, %v498
        %v819 = vand.u32 %v818, 8388607
        %v820 = vor.u32 %v819, 8388608
        %v821 = vsub.s32 0, %v820
        %v822 = vadd.s32 %v817, 1
        %vm823 = vcmp.gt.s32.totalorder %v822, 0
        %v824 = vsel %vm823, %v822, 0
        %v825 = vshrl.u32 %v824, 5
        %v826 = vand.u32 %v824, 31
        %v827 = vsub.s32 32, %v826
        %v828 = vshrl.u32 683565275, %v827
        %v829 = vshll.u32 683565275, %v826
        %v830 = vshrl.u32 2475754826, %v827
        %v831 = vor.u32 %v829, %v830
        %v832 = vshll.u32 2475754826, %v826
        %v833 = vshrl.u32 2131351028, %v827
        %v834 = vor.u32 %v832, %v833
        %v835 = vshll.u32 2131351028, %v826
        %v836 = vshrl.u32 2102212464, %v827
        %v837 = vor.u32 %v835, %v836
        %v838 = vshll.u32 2102212464, %v826
        %v839 = vshrl.u32 920167782, %v827
        %v840 = vor.u32 %v838, %v839
        %v841 = vshll.u32 920167782, %v826
        %v842 = vshrl.u32 1326507024, %v827
        %v843 = vor.u32 %v841, %v842
        %vm844 = vcmp.lt.s32.totalorder %v825, 1
        %vm845 = vcmp.lt.s32.totalorder %v825, 2
        %vm846 = vcmp.lt.s32.totalorder %v825, 3
        %vm847 = vcmp.lt.s32.totalorder %v825, 4
        %v848 = vsel %vm844, %v828, %v831
        %v849 = vsel %vm847, %v837, 2102212464
        %v850 = vsel %vm846, %v834, %v849
        %v851 = vsel %vm845, %v848, %v850
        %v852 = vsel %vm844, %v831, %v834
        %v853 = vsel %vm847, %v840, 920167782
        %v854 = vsel %vm846, %v837, %v853
        %v855 = vsel %vm845, %v852, %v854
        %v856 = vsel %vm844, %v834, %v837
        %v857 = vsel %vm847, %v843, 1326507024
        %v858 = vsel %vm846, %v840, %v857
        %v859 = vsel %vm845, %v856, %v858
        %v860 = vshll.u32 %v820, 8
        %v861 = vmul.u32.u64.compose %v860, %v859
        %v862 = vextract.low.u32 %v861
        %v863 = vextract.high.u32 %v861
        %v864 = vmul.u32.u64.compose %v860, %v855
        %v865 = vextract.low.u32 %v864
        %v866 = vextract.high.u32 %v864
        %v867 = vmul.u32 %v860, %v851
        %v868 = vadd.s32 %v863, %v865
        %vm869 = vc.u32 %v863, %v865
        %v870 = vadd.s32 %v866, 1
        %v871 = vsel %vm869, %v870, %v866
        %v872 = vadd.s32 %v867, %v871
        %v873 = vadd.s32 %v872, 536870912
        %v874 = vshrl.u32 %v873, 30
        %v875 = vshll.u32 %v874, 30
        %v876 = vsub.s32 %v872, %v875
        %vm877 = vcmp.lt.s32.totalorder %v876, 0
        %v878 = vsub.s32 0, %v876
        %v879 = vsel %vm877, %v878, %v876
        %v880 = vclz %v879
        %v881 = vsub.s32 %v880, 2
        %vm882 = vcmp.gt.s32.totalorder 0, %v881
        %v883 = vsel %vm882, 0, %v881
        %v884 = vsub.s32 32, %v883
        %v885 = vshll.u32 %v876, %v883
        %v886 = vshrl.u32 %v868, %v884
        %v887 = vor.u32 %v885, %v886
        %v888 = vsub.s32 4294967266, %v883
        %v889 = vadd.s32 %v888, 127
        %v890 = vshll.u32 %v889, 23
        %v891 = vor.u32 4788187, %v890
        %v892 = vand.u32 2147483647, %v891
        %v894 = vcvt.s32.f32 %v887
        %v895 = vmul.f32 %v894, %v892
        %v896 = vxor.u32 %v895, 2147483648
        %v897 = vsel %vm814, %v896, %v895
        %v898 = vsub.s32 4, %v874
        %v899 = vsel %vm814, %v898, %v874
        %v900 = vsel %vm813, %v498, %v897
        %v901 = vsel %vm813, 0, %v899
        %v902 = vcosq.f32.pop %v900
        %v903 = vsinq.f32.pop %v900
        %vm904 = vweird.f32 %v498
        %v905 = vand.u32 %v901, 3
        %vm906 = vcmp.lt.s32.totalorder %v905, 2
        %vm907 = vcmp.eq.s32.totalorder %v905, 0
        %v908 = vxor.u32 %v903, 2147483648
        %v909 = vsel %vm907, %v902, %v908
        %vm910 = vcmp.eq.s32.totalorder %v905, 2
        %v911 = vxor.u32 %v902, 2147483648
        %v912 = vsel %vm910, %v911, %v903
        %v913 = vsel %vm906, %v909, %v912
        %v914 = vsel %vm904, nan, %v913
        %v915 = vand.u32 2147483647, %v499
        %vm916 = vcmp.le.f32.partialorder %v915, 0.7853982
        %vm917 = vcmp.lt.s32.totalorder %v499, 0
        %v918 = vand.u32 %v499, 2139095040
        %v919 = vshrl.u32 %v918, 23
        %v920 = vsub.s32 %v919, 127
        %v921 = vand.u32 2147483647, %v499
        %v922 = vand.u32 %v921, 8388607
        %v923 = vor.u32 %v922, 8388608
        %v924 = vsub.s32 0, %v923
        %v925 = vadd.s32 %v920, 1
        %vm926 = vcmp.gt.s32.totalorder %v925, 0
        %v927 = vsel %vm926, %v925, 0
        %v928 = vshrl.u32 %v927, 5
        %v929 = vand.u32 %v927, 31
        %v930 = vsub.s32 32, %v929
        %v931 = vshrl.u32 683565275, %v930
        %v932 = vshll.u32 683565275, %v929
        %v933 = vshrl.u32 2475754826, %v930
        %v934 = vor.u32 %v932, %v933
        %v935 = vshll.u32 2475754826, %v929
        %v936 = vshrl.u32 2131351028, %v930
        %v937 = vor.u32 %v935, %v936
        %v938 = vshll.u32 2131351028, %v929
        %v939 = vshrl.u32 2102212464, %v930
        %v940 = vor.u32 %v938, %v939
        %v941 = vshll.u32 2102212464, %v929
        %v942 = vshrl.u32 920167782, %v930
        %v943 = vor.u32 %v941, %v942
        %v944 = vshll.u32 920167782, %v929
        %v945 = vshrl.u32 1326507024, %v930
        %v946 = vor.u32 %v944, %v945
        %vm947 = vcmp.lt.s32.totalorder %v928, 1
        %vm948 = vcmp.lt.s32.totalorder %v928, 2
        %vm949 = vcmp.lt.s32.totalorder %v928, 3
        %vm950 = vcmp.lt.s32.totalorder %v928, 4
        %v951 = vsel %vm947, %v931, %v934
        %v952 = vsel %vm950, %v940, 2102212464
        %v953 = vsel %vm949, %v937, %v952
        %v954 = vsel %vm948, %v951, %v953
        %v955 = vsel %vm947, %v934, %v937
        %v956 = vsel %vm950, %v943, 920167782
        %v957 = vsel %vm949, %v940, %v956
        %v958 = vsel %vm948, %v955, %v957
        %v959 = vsel %vm947, %v937, %v940
        %v960 = vsel %vm950, %v946, 1326507024
        %v961 = vsel %vm949, %v943, %v960
        %v962 = vsel %vm948, %v959, %v961
        %v963 = vshll.u32 %v923, 8
        %v964 = vmul.u32.u64.compose %v963, %v962
        %v965 = vextract.low.u32 %v964
        %v966 = vextract.high.u32 %v964
        %v967 = vmul.u32.u64.compose %v963, %v958
        %v968 = vextract.low.u32 %v967
        %v969 = vextract.high.u32 %v967
        %v970 = vmul.u32 %v963, %v954
        %v971 = vadd.s32 %v966, %v968
        %vm972 = vc.u32 %v966, %v968
        %v973 = vadd.s32 %v969, 1
        %v974 = vsel %vm972, %v973, %v969
        %v975 = vadd.s32 %v970, %v974
        %v976 = vadd.s32 %v975, 536870912
        %v977 = vshrl.u32 %v976, 30
        %v978 = vshll.u32 %v977, 30
        %v979 = vsub.s32 %v975, %v978
        %vm980 = vcmp.lt.s32.totalorder %v979, 0
        %v981 = vsub.s32 0, %v979
        %v982 = vsel %vm980, %v981, %v979
        %v983 = vclz %v982
        %v984 = vsub.s32 %v983, 2
        %vm985 = vcmp.gt.s32.totalorder 0, %v984
        %v986 = vsel %vm985, 0, %v984
        %v987 = vsub.s32 32, %v986
        %v988 = vshll.u32 %v979, %v986
        %v989 = vshrl.u32 %v971, %v987
        %v990 = vor.u32 %v988, %v989
        %v991 = vsub.s32 4294967266, %v986
        %v992 = vadd.s32 %v991, 127
        %v993 = vshll.u32 %v992, 23
        %v994 = vor.u32 4788187, %v993
        %v995 = vand.u32 2147483647, %v994
        %v997 = vcvt.s32.f32 %v990
        %v998 = vmul.f32 %v997, %v995
        %v999 = vxor.u32 %v998, 2147483648
        %v1000 = vsel %vm917, %v999, %v998
        %v1001 = vsub.s32 4, %v977
        %v1002 = vsel %vm917, %v1001, %v977
        %v1003 = vsel %vm916, %v499, %v1000
        %v1004 = vsel %vm916, 0, %v1002
        %v1005 = vcosq.f32.pop %v1003
        %v1006 = vsinq.f32.pop %v1003
        %vm1007 = vweird.f32 %v499
        %v1008 = vand.u32 %v1004, 3
        %vm1009 = vcmp.lt.s32.totalorder %v1008, 2
        %vm1010 = vcmp.eq.s32.totalorder %v1008, 0
        %v1011 = vxor.u32 %v1006, 2147483648
        %v1012 = vsel %vm1010, %v1005, %v1011
        %vm1013 = vcmp.eq.s32.totalorder %v1008, 2
        %v1014 = vxor.u32 %v1005, 2147483648
        %v1015 = vsel %vm1013, %v1014, %v1006
        %v1016 = vsel %vm1009, %v1012, %v1015
        %v1017 = vsel %vm1007, nan, %v1016
        %v1018 = vand.u32 2147483647, %v500
        %vm1019 = vcmp.le.f32.partialorder %v1018, 0.7853982
        %vm1020 = vcmp.lt.s32.totalorder %v500, 0
        %v1021 = vand.u32 %v500, 2139095040
        %v1022 = vshrl.u32 %v1021, 23
        %v1023 = vsub.s32 %v1022, 127
        %v1024 = vand.u32 2147483647, %v500
        %v1025 = vand.u32 %v1024, 8388607
        %v1026 = vor.u32 %v1025, 8388608
        %v1027 = vsub.s32 0, %v1026
        %v1028 = vadd.s32 %v1023, 1
        %vm1029 = vcmp.gt.s32.totalorder %v1028, 0
        %v1030 = vsel %vm1029, %v1028, 0
        %v1031 = vshrl.u32 %v1030, 5
        %v1032 = vand.u32 %v1030, 31
        %v1033 = vsub.s32 32, %v1032
        %v1034 = vshrl.u32 683565275, %v1033
        %v1035 = vshll.u32 683565275, %v1032
        %v1036 = vshrl.u32 2475754826, %v1033
        %v1037 = vor.u32 %v1035, %v1036
        %v1038 = vshll.u32 2475754826, %v1032
        %v1039 = vshrl.u32 2131351028, %v1033
        %v1040 = vor.u32 %v1038, %v1039
        %v1041 = vshll.u32 2131351028, %v1032
        %v1042 = vshrl.u32 2102212464, %v1033
        %v1043 = vor.u32 %v1041, %v1042
        %v1044 = vshll.u32 2102212464, %v1032
        %v1045 = vshrl.u32 920167782, %v1033
        %v1046 = vor.u32 %v1044, %v1045
        %v1047 = vshll.u32 920167782, %v1032
        %v1048 = vshrl.u32 1326507024, %v1033
        %v1049 = vor.u32 %v1047, %v1048
        %vm1050 = vcmp.lt.s32.totalorder %v1031, 1
        %vm1051 = vcmp.lt.s32.totalorder %v1031, 2
        %vm1052 = vcmp.lt.s32.totalorder %v1031, 3
        %vm1053 = vcmp.lt.s32.totalorder %v1031, 4
        %v1054 = vsel %vm1050, %v1034, %v1037
        %v1055 = vsel %vm1053, %v1043, 2102212464
        %v1056 = vsel %vm1052, %v1040, %v1055
        %v1057 = vsel %vm1051, %v1054, %v1056
        %v1058 = vsel %vm1050, %v1037, %v1040
        %v1059 = vsel %vm1053, %v1046, 920167782
        %v1060 = vsel %vm1052, %v1043, %v1059
        %v1061 = vsel %vm1051, %v1058, %v1060
        %v1062 = vsel %vm1050, %v1040, %v1043
        %v1063 = vsel %vm1053, %v1049, 1326507024
        %v1064 = vsel %vm1052, %v1046, %v1063
        %v1065 = vsel %vm1051, %v1062, %v1064
        %v1066 = vshll.u32 %v1026, 8
        %v1067 = vmul.u32.u64.compose %v1066, %v1065
        %v1068 = vextract.low.u32 %v1067
        %v1069 = vextract.high.u32 %v1067
        %v1070 = vmul.u32.u64.compose %v1066, %v1061
        %v1071 = vextract.low.u32 %v1070
        %v1072 = vextract.high.u32 %v1070
        %v1073 = vmul.u32 %v1066, %v1057
        %v1074 = vadd.s32 %v1069, %v1071
        %vm1075 = vc.u32 %v1069, %v1071
        %v1076 = vadd.s32 %v1072, 1
        %v1077 = vsel %vm1075, %v1076, %v1072
        %v1078 = vadd.s32 %v1073, %v1077
        %v1079 = vadd.s32 %v1078, 536870912
        %v1080 = vshrl.u32 %v1079, 30
        %v1081 = vshll.u32 %v1080, 30
        %v1082 = vsub.s32 %v1078, %v1081
        %vm1083 = vcmp.lt.s32.totalorder %v1082, 0
        %v1084 = vsub.s32 0, %v1082
        %v1085 = vsel %vm1083, %v1084, %v1082
        %v1086 = vclz %v1085
        %v1087 = vsub.s32 %v1086, 2
        %vm1088 = vcmp.gt.s32.totalorder 0, %v1087
        %v1089 = vsel %vm1088, 0, %v1087
        %v1090 = vsub.s32 32, %v1089
        %v1091 = vshll.u32 %v1082, %v1089
        %v1092 = vshrl.u32 %v1074, %v1090
        %v1093 = vor.u32 %v1091, %v1092
        %v1094 = vsub.s32 4294967266, %v1089
        %v1095 = vadd.s32 %v1094, 127
        %v1096 = vshll.u32 %v1095, 23
        %v1097 = vor.u32 4788187, %v1096
        %v1098 = vand.u32 2147483647, %v1097
        %v1100 = vcvt.s32.f32 %v1093
        %v1101 = vmul.f32 %v1100, %v1098
        %v1102 = vxor.u32 %v1101, 2147483648
        %v1103 = vsel %vm1020, %v1102, %v1101
        %v1104 = vsub.s32 4, %v1080
        %v1105 = vsel %vm1020, %v1104, %v1080
        %v1106 = vsel %vm1019, %v500, %v1103
        %v1107 = vsel %vm1019, 0, %v1105
        %v1108 = vcosq.f32.pop %v1106
        %v1109 = vsinq.f32.pop %v1106
        %vm1110 = vweird.f32 %v500
        %v1111 = vand.u32 %v1107, 3
        %vm1112 = vcmp.lt.s32.totalorder %v1111, 2
        %vm1113 = vcmp.eq.s32.totalorder %v1111, 0
        %v1114 = vxor.u32 %v1109, 2147483648
        %v1115 = vsel %vm1113, %v1108, %v1114
        %vm1116 = vcmp.eq.s32.totalorder %v1111, 2
        %v1117 = vxor.u32 %v1108, 2147483648
        %v1118 = vsel %vm1116, %v1117, %v1109
        %v1119 = vsel %vm1112, %v1115, %v1118
        %v1120 = vsel %vm1110, nan, %v1119
        %v1121 = vand.u32 2147483647, %v501
        %vm1122 = vcmp.le.f32.partialorder %v1121, 0.7853982
        %vm1123 = vcmp.lt.s32.totalorder %v501, 0
        %v1124 = vand.u32 %v501, 2139095040
        %v1125 = vshrl.u32 %v1124, 23
        %v1126 = vsub.s32 %v1125, 127
        %v1127 = vand.u32 2147483647, %v501
        %v1128 = vand.u32 %v1127, 8388607
        %v1129 = vor.u32 %v1128, 8388608
        %v1130 = vsub.s32 0, %v1129
        %v1131 = vadd.s32 %v1126, 1
        %vm1132 = vcmp.gt.s32.totalorder %v1131, 0
        %v1133 = vsel %vm1132, %v1131, 0
        %v1134 = vshrl.u32 %v1133, 5
        %v1135 = vand.u32 %v1133, 31
        %v1136 = vsub.s32 32, %v1135
        %v1137 = vshrl.u32 683565275, %v1136
        %v1138 = vshll.u32 683565275, %v1135
        %v1139 = vshrl.u32 2475754826, %v1136
        %v1140 = vor.u32 %v1138, %v1139
        %v1141 = vshll.u32 2475754826, %v1135
        %v1142 = vshrl.u32 2131351028, %v1136
        %v1143 = vor.u32 %v1141, %v1142
        %v1144 = vshll.u32 2131351028, %v1135
        %v1145 = vshrl.u32 2102212464, %v1136
        %v1146 = vor.u32 %v1144, %v1145
        %v1147 = vshll.u32 2102212464, %v1135
        %v1148 = vshrl.u32 920167782, %v1136
        %v1149 = vor.u32 %v1147, %v1148
        %v1150 = vshll.u32 920167782, %v1135
        %v1151 = vshrl.u32 1326507024, %v1136
        %v1152 = vor.u32 %v1150, %v1151
        %vm1153 = vcmp.lt.s32.totalorder %v1134, 1
        %vm1154 = vcmp.lt.s32.totalorder %v1134, 2
        %vm1155 = vcmp.lt.s32.totalorder %v1134, 3
        %vm1156 = vcmp.lt.s32.totalorder %v1134, 4
        %v1157 = vsel %vm1153, %v1137, %v1140
        %v1158 = vsel %vm1156, %v1146, 2102212464
        %v1159 = vsel %vm1155, %v1143, %v1158
        %v1160 = vsel %vm1154, %v1157, %v1159
        %v1161 = vsel %vm1153, %v1140, %v1143
        %v1162 = vsel %vm1156, %v1149, 920167782
        %v1163 = vsel %vm1155, %v1146, %v1162
        %v1164 = vsel %vm1154, %v1161, %v1163
        %v1165 = vsel %vm1153, %v1143, %v1146
        %v1166 = vsel %vm1156, %v1152, 1326507024
        %v1167 = vsel %vm1155, %v1149, %v1166
        %v1168 = vsel %vm1154, %v1165, %v1167
        %v1169 = vshll.u32 %v1129, 8
        %v1170 = vmul.u32.u64.compose %v1169, %v1168
        %v1171 = vextract.low.u32 %v1170
        %v1172 = vextract.high.u32 %v1170
        %v1173 = vmul.u32.u64.compose %v1169, %v1164
        %v1174 = vextract.low.u32 %v1173
        %v1175 = vextract.high.u32 %v1173
        %v1176 = vmul.u32 %v1169, %v1160
        %v1177 = vadd.s32 %v1172, %v1174
        %vm1178 = vc.u32 %v1172, %v1174
        %v1179 = vadd.s32 %v1175, 1
        %v1180 = vsel %vm1178, %v1179, %v1175
        %v1181 = vadd.s32 %v1176, %v1180
        %v1182 = vadd.s32 %v1181, 536870912
        %v1183 = vshrl.u32 %v1182, 30
        %v1184 = vshll.u32 %v1183, 30
        %v1185 = vsub.s32 %v1181, %v1184
        %vm1186 = vcmp.lt.s32.totalorder %v1185, 0
        %v1187 = vsub.s32 0, %v1185
        %v1188 = vsel %vm1186, %v1187, %v1185
        %v1189 = vclz %v1188
        %v1190 = vsub.s32 %v1189, 2
        %vm1191 = vcmp.gt.s32.totalorder 0, %v1190
        %v1192 = vsel %vm1191, 0, %v1190
        %v1193 = vsub.s32 32, %v1192
        %v1194 = vshll.u32 %v1185, %v1192
        %v1195 = vshrl.u32 %v1177, %v1193
        %v1196 = vor.u32 %v1194, %v1195
        %v1197 = vsub.s32 4294967266, %v1192
        %v1198 = vadd.s32 %v1197, 127
        %v1199 = vshll.u32 %v1198, 23
        %v1200 = vor.u32 4788187, %v1199
        %v1201 = vand.u32 2147483647, %v1200
        %v1203 = vcvt.s32.f32 %v1196
        %v1204 = vmul.f32 %v1203, %v1201
        %v1205 = vxor.u32 %v1204, 2147483648
        %v1206 = vsel %vm1123, %v1205, %v1204
        %v1207 = vsub.s32 4, %v1183
        %v1208 = vsel %vm1123, %v1207, %v1183
        %v1209 = vsel %vm1122, %v501, %v1206
        %v1210 = vsel %vm1122, 0, %v1208
        %v1211 = vcosq.f32.pop %v1209
        %v1212 = vsinq.f32.pop %v1209
        %vm1213 = vweird.f32 %v501
        %v1214 = vand.u32 %v1210, 3
        %vm1215 = vcmp.lt.s32.totalorder %v1214, 2
        %vm1216 = vcmp.eq.s32.totalorder %v1214, 0
        %v1217 = vxor.u32 %v1212, 2147483648
        %v1218 = vsel %vm1216, %v1211, %v1217
        %vm1219 = vcmp.eq.s32.totalorder %v1214, 2
        %v1220 = vxor.u32 %v1211, 2147483648
        %v1221 = vsel %vm1219, %v1220, %v1212
        %v1222 = vsel %vm1215, %v1218, %v1221
        %v1223 = vsel %vm1213, nan, %v1222
        %v1224 = vand.u32 2147483647, %v502
        %vm1225 = vcmp.le.f32.partialorder %v1224, 0.7853982
        %vm1226 = vcmp.lt.s32.totalorder %v502, 0
        %v1227 = vand.u32 %v502, 2139095040
        %v1228 = vshrl.u32 %v1227, 23
        %v1229 = vsub.s32 %v1228, 127
        %v1230 = vand.u32 2147483647, %v502
        %v1231 = vand.u32 %v1230, 8388607
        %v1232 = vor.u32 %v1231, 8388608
        %v1233 = vsub.s32 0, %v1232
        %v1234 = vadd.s32 %v1229, 1
        %vm1235 = vcmp.gt.s32.totalorder %v1234, 0
        %v1236 = vsel %vm1235, %v1234, 0
        %v1237 = vshrl.u32 %v1236, 5
        %v1238 = vand.u32 %v1236, 31
        %v1239 = vsub.s32 32, %v1238
        %v1240 = vshrl.u32 683565275, %v1239
        %v1241 = vshll.u32 683565275, %v1238
        %v1242 = vshrl.u32 2475754826, %v1239
        %v1243 = vor.u32 %v1241, %v1242
        %v1244 = vshll.u32 2475754826, %v1238
        %v1245 = vshrl.u32 2131351028, %v1239
        %v1246 = vor.u32 %v1244, %v1245
        %v1247 = vshll.u32 2131351028, %v1238
        %v1248 = vshrl.u32 2102212464, %v1239
        %v1249 = vor.u32 %v1247, %v1248
        %v1250 = vshll.u32 2102212464, %v1238
        %v1251 = vshrl.u32 920167782, %v1239
        %v1252 = vor.u32 %v1250, %v1251
        %v1253 = vshll.u32 920167782, %v1238
        %v1254 = vshrl.u32 1326507024, %v1239
        %v1255 = vor.u32 %v1253, %v1254
        %vm1256 = vcmp.lt.s32.totalorder %v1237, 1
        %vm1257 = vcmp.lt.s32.totalorder %v1237, 2
        %vm1258 = vcmp.lt.s32.totalorder %v1237, 3
        %vm1259 = vcmp.lt.s32.totalorder %v1237, 4
        %v1260 = vsel %vm1256, %v1240, %v1243
        %v1261 = vsel %vm1259, %v1249, 2102212464
        %v1262 = vsel %vm1258, %v1246, %v1261
        %v1263 = vsel %vm1257, %v1260, %v1262
        %v1264 = vsel %vm1256, %v1243, %v1246
        %v1265 = vsel %vm1259, %v1252, 920167782
        %v1266 = vsel %vm1258, %v1249, %v1265
        %v1267 = vsel %vm1257, %v1264, %v1266
        %v1268 = vsel %vm1256, %v1246, %v1249
        %v1269 = vsel %vm1259, %v1255, 1326507024
        %v1270 = vsel %vm1258, %v1252, %v1269
        %v1271 = vsel %vm1257, %v1268, %v1270
        %v1272 = vshll.u32 %v1232, 8
        %v1273 = vmul.u32.u64.compose %v1272, %v1271
        %v1274 = vextract.low.u32 %v1273
        %v1275 = vextract.high.u32 %v1273
        %v1276 = vmul.u32.u64.compose %v1272, %v1267
        %v1277 = vextract.low.u32 %v1276
        %v1278 = vextract.high.u32 %v1276
        %v1279 = vmul.u32 %v1272, %v1263
        %v1280 = vadd.s32 %v1275, %v1277
        %vm1281 = vc.u32 %v1275, %v1277
        %v1282 = vadd.s32 %v1278, 1
        %v1283 = vsel %vm1281, %v1282, %v1278
        %v1284 = vadd.s32 %v1279, %v1283
        %v1285 = vadd.s32 %v1284, 536870912
        %v1286 = vshrl.u32 %v1285, 30
        %v1287 = vshll.u32 %v1286, 30
        %v1288 = vsub.s32 %v1284, %v1287
        %vm1289 = vcmp.lt.s32.totalorder %v1288, 0
        %v1290 = vsub.s32 0, %v1288
        %v1291 = vsel %vm1289, %v1290, %v1288
        %v1292 = vclz %v1291
        %v1293 = vsub.s32 %v1292, 2
        %vm1294 = vcmp.gt.s32.totalorder 0, %v1293
        %v1295 = vsel %vm1294, 0, %v1293
        %v1296 = vsub.s32 32, %v1295
        %v1297 = vshll.u32 %v1288, %v1295
        %v1298 = vshrl.u32 %v1280, %v1296
        %v1299 = vor.u32 %v1297, %v1298
        %v1300 = vsub.s32 4294967266, %v1295
        %v1301 = vadd.s32 %v1300, 127
        %v1302 = vshll.u32 %v1301, 23
        %v1303 = vor.u32 4788187, %v1302
        %v1304 = vand.u32 2147483647, %v1303
        %v1306 = vcvt.s32.f32 %v1299
        %v1307 = vmul.f32 %v1306, %v1304
        %v1308 = vxor.u32 %v1307, 2147483648
        %v1309 = vsel %vm1226, %v1308, %v1307
        %v1310 = vsub.s32 4, %v1286
        %v1311 = vsel %vm1226, %v1310, %v1286
        %v1312 = vsel %vm1225, %v502, %v1309
        %v1313 = vsel %vm1225, 0, %v1311
        %v1314 = vcosq.f32.pop %v1312
        %v1315 = vsinq.f32.pop %v1312
        %vm1316 = vweird.f32 %v502
        %v1317 = vand.u32 %v1313, 3
        %vm1318 = vcmp.lt.s32.totalorder %v1317, 2
        %vm1319 = vcmp.eq.s32.totalorder %v1317, 0
        %v1320 = vxor.u32 %v1315, 2147483648
        %v1321 = vsel %vm1319, %v1314, %v1320
        %vm1322 = vcmp.eq.s32.totalorder %v1317, 2
        %v1323 = vxor.u32 %v1314, 2147483648
        %v1324 = vsel %vm1322, %v1323, %v1315
        %v1325 = vsel %vm1318, %v1321, %v1324
        %v1326 = vsel %vm1316, nan, %v1325
        %v1327 = vadd.f32 %v605, 1.0
        %v1328 = vadd.f32 %v708, 1.0
        %v1329 = vadd.f32 %v811, 1.0
        %v1330 = vadd.f32 %v914, 1.0
        %v1331 = vadd.f32 %v1017, 1.0
        %v1332 = vadd.f32 %v1120, 1.0
        %v1333 = vadd.f32 %v1223, 1.0
        %v1334 = vadd.f32 %v1326, 1.0
        %v1335 = vmul.f32 %v1327, 0.5
        %v1336 = vmul.f32 %v1328, 0.5
        %v1337 = vmul.f32 %v1329, 0.5
        %v1338 = vmul.f32 %v1330, 0.5
        %v1339 = vmul.f32 %v1331, 0.5
        %v1340 = vmul.f32 %v1332, 0.5
        %v1341 = vmul.f32 %v1333, 0.5
        %v1342 = vmul.f32 %v1334, 0.5
        %vm1343 = vcmp.lt.f32.partialorder %v213, 0.35
        %vm1344 = vcmp.lt.f32.partialorder %v220, 0.35
        %vm1345 = vcmp.lt.f32.partialorder %v227, 0.35
        %vm1346 = vcmp.lt.f32.partialorder %v234, 0.35
        %vm1347 = vcmp.lt.f32.partialorder %v241, 0.35
        %vm1348 = vcmp.lt.f32.partialorder %v248, 0.35
        %vm1349 = vcmp.lt.f32.partialorder %v255, 0.35
        %vm1350 = vcmp.lt.f32.partialorder %v262, 0.35
        %v1351 = vsel %vm1343, 1, 0
        %v1352 = vsel %vm1344, 1, 0
        %v1353 = vsel %vm1345, 1, 0
        %v1354 = vsel %vm1346, 1, 0
        %v1355 = vsel %vm1347, 1, 0
        %v1356 = vsel %vm1348, 1, 0
        %v1357 = vsel %vm1349, 1, 0
        %v1358 = vsel %vm1350, 1, 0
        %v1359 = vcvt.s32.f32 %v1351
        %v1360 = vcvt.s32.f32 %v1352
        %v1361 = vcvt.s32.f32 %v1353
        %v1362 = vcvt.s32.f32 %v1354
        %v1363 = vcvt.s32.f32 %v1355
        %v1364 = vcvt.s32.f32 %v1356
        %v1365 = vcvt.s32.f32 %v1357
        %v1366 = vcvt.s32.f32 %v1358
        %v1367 = vmul.f32 %v1335, %v1359
        %v1368 = vmul.f32 %v1336, %v1360
        %v1369 = vmul.f32 %v1337, %v1361
        %v1370 = vmul.f32 %v1338, %v1362
        %v1371 = vmul.f32 %v1339, %v1363
        %v1372 = vmul.f32 %v1340, %v1364
        %v1373 = vmul.f32 %v1341, %v1365
        %v1374 = vmul.f32 %v1342, %v1366
        %v1375 = vmul.f32 %v1367, 2.0
        %v1376 = vmul.f32 %v1368, 2.0
        %v1377 = vmul.f32 %v1369, 2.0
        %v1378 = vmul.f32 %v1370, 2.0
        %v1379 = vmul.f32 %v1371, 2.0
        %v1380 = vmul.f32 %v1372, 2.0
        %v1381 = vmul.f32 %v1373, 2.0
        %v1382 = vmul.f32 %v1374, 2.0
        %v1391 = vrot.slane %v1367, 3
        %v1392 = vrot.slane %v1368, 3
        %v1393 = vrot.slane %v1369, 3
        %v1394 = vrot.slane %v1370, 3
        %v1395 = vrot.slane %v1371, 3
        %v1396 = vrot.slane %v1372, 3
        %v1397 = vrot.slane %v1373, 3
        %v1398 = vrot.slane %v1374, 3
        %v1407 = vmul.f32 %v1375, %v1391
        %v1408 = vmul.f32 %v1376, %v1392
        %v1409 = vmul.f32 %v1377, %v1393
        %v1410 = vmul.f32 %v1378, %v1394
        %v1411 = vmul.f32 %v1379, %v1395
        %v1412 = vmul.f32 %v1380, %v1396
        %v1413 = vmul.f32 %v1381, %v1397
        %v1414 = vmul.f32 %v1382, %v1398
        %v1415 = vadd.f32 %v213, %v367
        %v1416 = vadd.f32 %v220, %v368
        %v1417 = vadd.f32 %v227, %v369
        %v1418 = vadd.f32 %v234, %v370
        %v1419 = vadd.f32 %v241, %v371
        %v1420 = vadd.f32 %v248, %v372
        %v1421 = vadd.f32 %v255, %v373
        %v1422 = vadd.f32 %v262, %v374
        %v1423 = vmul.f32 %v1415, 0.5
        %v1424 = vmul.f32 %v1416, 0.5
        %v1425 = vmul.f32 %v1417, 0.5
        %v1426 = vmul.f32 %v1418, 0.5
        %v1427 = vmul.f32 %v1419, 0.5
        %v1428 = vmul.f32 %v1420, 0.5
        %v1429 = vmul.f32 %v1421, 0.5
        %v1430 = vmul.f32 %v1422, 0.5
        %v1431 = vlaneseq
        %v1432 = vshrl.u32 %v1431, 7
        %v1433 = vcvt.s32.f32 %v1432
        %v1434 = vmul.f32 %v1433, 0.03375
        %v1435 = vadd.f32 %v1434, 0.08
        %v1436 = vmul.f32 %v1433, 0.7853982
        %v1437 = vadd.f32 %v1436, 0.3926991
        %v1438 = vand.u32 2147483647, %v1437
        %vm1439 = vcmp.le.f32.partialorder %v1438, 0.7853982
        %vm1440 = vcmp.lt.s32.totalorder %v1437, 0
        %v1441 = vand.u32 %v1437, 2139095040
        %v1442 = vshrl.u32 %v1441, 23
        %v1443 = vsub.s32 %v1442, 127
        %v1444 = vand.u32 2147483647, %v1437
        %v1445 = vand.u32 %v1444, 8388607
        %v1446 = vor.u32 %v1445, 8388608
        %v1447 = vsub.s32 0, %v1446
        %v1448 = vadd.s32 %v1443, 1
        %vm1449 = vcmp.gt.s32.totalorder %v1448, 0
        %v1450 = vsel %vm1449, %v1448, 0
        %v1451 = vshrl.u32 %v1450, 5
        %v1452 = vand.u32 %v1450, 31
        %v1453 = vsub.s32 32, %v1452
        %v1454 = vshrl.u32 683565275, %v1453
        %v1455 = vshll.u32 683565275, %v1452
        %v1456 = vshrl.u32 2475754826, %v1453
        %v1457 = vor.u32 %v1455, %v1456
        %v1458 = vshll.u32 2475754826, %v1452
        %v1459 = vshrl.u32 2131351028, %v1453
        %v1460 = vor.u32 %v1458, %v1459
        %v1461 = vshll.u32 2131351028, %v1452
        %v1462 = vshrl.u32 2102212464, %v1453
        %v1463 = vor.u32 %v1461, %v1462
        %v1464 = vshll.u32 2102212464, %v1452
        %v1465 = vshrl.u32 920167782, %v1453
        %v1466 = vor.u32 %v1464, %v1465
        %v1467 = vshll.u32 920167782, %v1452
        %v1468 = vshrl.u32 1326507024, %v1453
        %v1469 = vor.u32 %v1467, %v1468
        %vm1470 = vcmp.lt.s32.totalorder %v1451, 1
        %vm1471 = vcmp.lt.s32.totalorder %v1451, 2
        %vm1472 = vcmp.lt.s32.totalorder %v1451, 3
        %vm1473 = vcmp.lt.s32.totalorder %v1451, 4
        %v1474 = vsel %vm1470, %v1454, %v1457
        %v1475 = vsel %vm1473, %v1463, 2102212464
        %v1476 = vsel %vm1472, %v1460, %v1475
        %v1477 = vsel %vm1471, %v1474, %v1476
        %v1478 = vsel %vm1470, %v1457, %v1460
        %v1479 = vsel %vm1473, %v1466, 920167782
        %v1480 = vsel %vm1472, %v1463, %v1479
        %v1481 = vsel %vm1471, %v1478, %v1480
        %v1482 = vsel %vm1470, %v1460, %v1463
        %v1483 = vsel %vm1473, %v1469, 1326507024
        %v1484 = vsel %vm1472, %v1466, %v1483
        %v1485 = vsel %vm1471, %v1482, %v1484
        %v1486 = vshll.u32 %v1446, 8
        %v1487 = vmul.u32.u64.compose %v1486, %v1485
        %v1488 = vextract.low.u32 %v1487
        %v1489 = vextract.high.u32 %v1487
        %v1490 = vmul.u32.u64.compose %v1486, %v1481
        %v1491 = vextract.low.u32 %v1490
        %v1492 = vextract.high.u32 %v1490
        %v1493 = vmul.u32 %v1486, %v1477
        %v1494 = vadd.s32 %v1489, %v1491
        %vm1495 = vc.u32 %v1489, %v1491
        %v1496 = vadd.s32 %v1492, 1
        %v1497 = vsel %vm1495, %v1496, %v1492
        %v1498 = vadd.s32 %v1493, %v1497
        %v1499 = vadd.s32 %v1498, 536870912
        %v1500 = vshrl.u32 %v1499, 30
        %v1501 = vshll.u32 %v1500, 30
        %v1502 = vsub.s32 %v1498, %v1501
        %vm1503 = vcmp.lt.s32.totalorder %v1502, 0
        %v1504 = vsub.s32 0, %v1502
        %v1505 = vsel %vm1503, %v1504, %v1502
        %v1506 = vclz %v1505
        %v1507 = vsub.s32 %v1506, 2
        %vm1508 = vcmp.gt.s32.totalorder 0, %v1507
        %v1509 = vsel %vm1508, 0, %v1507
        %v1510 = vsub.s32 32, %v1509
        %v1511 = vshll.u32 %v1502, %v1509
        %v1512 = vshrl.u32 %v1494, %v1510
        %v1513 = vor.u32 %v1511, %v1512
        %v1514 = vsub.s32 4294967266, %v1509
        %v1515 = vadd.s32 %v1514, 127
        %v1516 = vshll.u32 %v1515, 23
        %v1517 = vor.u32 4788187, %v1516
        %v1518 = vand.u32 2147483647, %v1517
        %v1520 = vcvt.s32.f32 %v1513
        %v1521 = vmul.f32 %v1520, %v1518
        %v1522 = vxor.u32 %v1521, 2147483648
        %v1523 = vsel %vm1440, %v1522, %v1521
        %v1524 = vsub.s32 4, %v1500
        %v1525 = vsel %vm1440, %v1524, %v1500
        %v1526 = vsel %vm1439, %v1437, %v1523
        %v1527 = vsel %vm1439, 0, %v1525
        %v1528 = vcosq.f32.pop %v1526
        %v1529 = vsinq.f32.pop %v1526
        %vm1530 = vweird.f32 %v1437
        %v1531 = vand.u32 %v1527, 3
        %vm1532 = vcmp.lt.s32.totalorder %v1531, 2
        %vm1533 = vcmp.eq.s32.totalorder %v1531, 0
        %v1534 = vxor.u32 %v1529, 2147483648
        %v1535 = vsel %vm1533, %v1528, %v1534
        %vm1536 = vcmp.eq.s32.totalorder %v1531, 2
        %v1537 = vxor.u32 %v1528, 2147483648
        %v1538 = vsel %vm1536, %v1537, %v1529
        %v1539 = vsel %vm1532, %v1535, %v1538
        %v1540 = vsel %vm1530, nan, %v1539
        %v1541 = vsub.f32 %v1437, 1.5707964
        %v1542 = vand.u32 2147483647, %v1541
        %vm1543 = vcmp.le.f32.partialorder %v1542, 0.7853982
        %vm1544 = vcmp.lt.s32.totalorder %v1541, 0
        %v1545 = vand.u32 %v1541, 2139095040
        %v1546 = vshrl.u32 %v1545, 23
        %v1547 = vsub.s32 %v1546, 127
        %v1548 = vand.u32 2147483647, %v1541
        %v1549 = vand.u32 %v1548, 8388607
        %v1550 = vor.u32 %v1549, 8388608
        %v1551 = vsub.s32 0, %v1550
        %v1552 = vadd.s32 %v1547, 1
        %vm1553 = vcmp.gt.s32.totalorder %v1552, 0
        %v1554 = vsel %vm1553, %v1552, 0
        %v1555 = vshrl.u32 %v1554, 5
        %v1556 = vand.u32 %v1554, 31
        %v1557 = vsub.s32 32, %v1556
        %v1558 = vshrl.u32 683565275, %v1557
        %v1559 = vshll.u32 683565275, %v1556
        %v1560 = vshrl.u32 2475754826, %v1557
        %v1561 = vor.u32 %v1559, %v1560
        %v1562 = vshll.u32 2475754826, %v1556
        %v1563 = vshrl.u32 2131351028, %v1557
        %v1564 = vor.u32 %v1562, %v1563
        %v1565 = vshll.u32 2131351028, %v1556
        %v1566 = vshrl.u32 2102212464, %v1557
        %v1567 = vor.u32 %v1565, %v1566
        %v1568 = vshll.u32 2102212464, %v1556
        %v1569 = vshrl.u32 920167782, %v1557
        %v1570 = vor.u32 %v1568, %v1569
        %v1571 = vshll.u32 920167782, %v1556
        %v1572 = vshrl.u32 1326507024, %v1557
        %v1573 = vor.u32 %v1571, %v1572
        %vm1574 = vcmp.lt.s32.totalorder %v1555, 1
        %vm1575 = vcmp.lt.s32.totalorder %v1555, 2
        %vm1576 = vcmp.lt.s32.totalorder %v1555, 3
        %vm1577 = vcmp.lt.s32.totalorder %v1555, 4
        %v1578 = vsel %vm1574, %v1558, %v1561
        %v1579 = vsel %vm1577, %v1567, 2102212464
        %v1580 = vsel %vm1576, %v1564, %v1579
        %v1581 = vsel %vm1575, %v1578, %v1580
        %v1582 = vsel %vm1574, %v1561, %v1564
        %v1583 = vsel %vm1577, %v1570, 920167782
        %v1584 = vsel %vm1576, %v1567, %v1583
        %v1585 = vsel %vm1575, %v1582, %v1584
        %v1586 = vsel %vm1574, %v1564, %v1567
        %v1587 = vsel %vm1577, %v1573, 1326507024
        %v1588 = vsel %vm1576, %v1570, %v1587
        %v1589 = vsel %vm1575, %v1586, %v1588
        %v1590 = vshll.u32 %v1550, 8
        %v1591 = vmul.u32.u64.compose %v1590, %v1589
        %v1592 = vextract.low.u32 %v1591
        %v1593 = vextract.high.u32 %v1591
        %v1594 = vmul.u32.u64.compose %v1590, %v1585
        %v1595 = vextract.low.u32 %v1594
        %v1596 = vextract.high.u32 %v1594
        %v1597 = vmul.u32 %v1590, %v1581
        %v1598 = vadd.s32 %v1593, %v1595
        %vm1599 = vc.u32 %v1593, %v1595
        %v1600 = vadd.s32 %v1596, 1
        %v1601 = vsel %vm1599, %v1600, %v1596
        %v1602 = vadd.s32 %v1597, %v1601
        %v1603 = vadd.s32 %v1602, 536870912
        %v1604 = vshrl.u32 %v1603, 30
        %v1605 = vshll.u32 %v1604, 30
        %v1606 = vsub.s32 %v1602, %v1605
        %vm1607 = vcmp.lt.s32.totalorder %v1606, 0
        %v1608 = vsub.s32 0, %v1606
        %v1609 = vsel %vm1607, %v1608, %v1606
        %v1610 = vclz %v1609
        %v1611 = vsub.s32 %v1610, 2
        %vm1612 = vcmp.gt.s32.totalorder 0, %v1611
        %v1613 = vsel %vm1612, 0, %v1611
        %v1614 = vsub.s32 32, %v1613
        %v1615 = vshll.u32 %v1606, %v1613
        %v1616 = vshrl.u32 %v1598, %v1614
        %v1617 = vor.u32 %v1615, %v1616
        %v1618 = vsub.s32 4294967266, %v1613
        %v1619 = vadd.s32 %v1618, 127
        %v1620 = vshll.u32 %v1619, 23
        %v1621 = vor.u32 4788187, %v1620
        %v1622 = vand.u32 2147483647, %v1621
        %v1624 = vcvt.s32.f32 %v1617
        %v1625 = vmul.f32 %v1624, %v1622
        %v1626 = vxor.u32 %v1625, 2147483648
        %v1627 = vsel %vm1544, %v1626, %v1625
        %v1628 = vsub.s32 4, %v1604
        %v1629 = vsel %vm1544, %v1628, %v1604
        %v1630 = vsel %vm1543, %v1541, %v1627
        %v1631 = vsel %vm1543, 0, %v1629
        %v1632 = vcosq.f32.pop %v1630
        %v1633 = vsinq.f32.pop %v1630
        %vm1634 = vweird.f32 %v1541
        %v1635 = vand.u32 %v1631, 3
        %vm1636 = vcmp.lt.s32.totalorder %v1635, 2
        %vm1637 = vcmp.eq.s32.totalorder %v1635, 0
        %v1638 = vxor.u32 %v1633, 2147483648
        %v1639 = vsel %vm1637, %v1632, %v1638
        %vm1640 = vcmp.eq.s32.totalorder %v1635, 2
        %v1641 = vxor.u32 %v1632, 2147483648
        %v1642 = vsel %vm1640, %v1641, %v1633
        %v1643 = vsel %vm1636, %v1639, %v1642
        %v1644 = vsel %vm1634, nan, %v1643
        %v1645 = vlaneseq
        %v1646 = vshrl.u32 %v1645, 7
        %v1647 = vsub.s32 0, %v1646
        %v1648 = vrot.slane %v1423, %v1647
        %v1649 = vlaneseq
        %v1650 = vshrl.u32 %v1649, 7
        %v1651 = vsub.s32 0, %v1650
        %v1652 = vrot.slane %v1424, %v1651
        %v1653 = vlaneseq
        %v1654 = vshrl.u32 %v1653, 7
        %v1655 = vsub.s32 0, %v1654
        %v1656 = vrot.slane %v1425, %v1655
        %v1657 = vlaneseq
        %v1658 = vshrl.u32 %v1657, 7
        %v1659 = vsub.s32 0, %v1658
        %v1660 = vrot.slane %v1426, %v1659
        %v1661 = vlaneseq
        %v1662 = vshrl.u32 %v1661, 7
        %v1663 = vsub.s32 0, %v1662
        %v1664 = vrot.slane %v1427, %v1663
        %v1665 = vlaneseq
        %v1666 = vshrl.u32 %v1665, 7
        %v1667 = vsub.s32 0, %v1666
        %v1668 = vrot.slane %v1428, %v1667
        %v1669 = vlaneseq
        %v1670 = vshrl.u32 %v1669, 7
        %v1671 = vsub.s32 0, %v1670
        %v1672 = vrot.slane %v1429, %v1671
        %v1673 = vlaneseq
        %v1674 = vshrl.u32 %v1673, 7
        %v1675 = vsub.s32 0, %v1674
        %v1676 = vrot.slane %v1430, %v1675
        %v1677 = vsub.f32 %v1648, %v1435
        %v1678 = vsub.f32 %v1652, %v1435
        %v1679 = vsub.f32 %v1656, %v1435
        %v1680 = vsub.f32 %v1660, %v1435
        %v1681 = vsub.f32 %v1664, %v1435
        %v1682 = vsub.f32 %v1668, %v1435
        %v1683 = vsub.f32 %v1672, %v1435
        %v1684 = vsub.f32 %v1676, %v1435
        %v1685 = vmul.f32 %v1677, -1250.0
        %v1686 = vmul.f32 %v1678, -1250.0
        %v1687 = vmul.f32 %v1679, -1250.0
        %v1688 = vmul.f32 %v1680, -1250.0
        %v1689 = vmul.f32 %v1681, -1250.0
        %v1690 = vmul.f32 %v1682, -1250.0
        %v1691 = vmul.f32 %v1683, -1250.0
        %v1692 = vmul.f32 %v1684, -1250.0
        %v1693 = vmul.f32 %v1685, %v1677
        %v1694 = vmul.f32 %v1686, %v1678
        %v1695 = vmul.f32 %v1687, %v1679
        %v1696 = vmul.f32 %v1688, %v1680
        %v1697 = vmul.f32 %v1689, %v1681
        %v1698 = vmul.f32 %v1690, %v1682
        %v1699 = vmul.f32 %v1691, %v1683
        %v1700 = vmul.f32 %v1692, %v1684
        %v1701 = vmul.f32 %v1693, 1.442695
        %v1702 = vpow.pop %v1701
        %v1703 = vmul.f32 %v1694, 1.442695
        %v1704 = vpow.pop %v1703
        %v1705 = vmul.f32 %v1695, 1.442695
        %v1706 = vpow.pop %v1705
        %v1707 = vmul.f32 %v1696, 1.442695
        %v1708 = vpow.pop %v1707
        %v1709 = vmul.f32 %v1697, 1.442695
        %v1710 = vpow.pop %v1709
        %v1711 = vmul.f32 %v1698, 1.442695
        %v1712 = vpow.pop %v1711
        %v1713 = vmul.f32 %v1699, 1.442695
        %v1714 = vpow.pop %v1713
        %v1715 = vmul.f32 %v1700, 1.442695
        %v1716 = vpow.pop %v1715
        %v1717 = vlaneseq
        %v1718 = vshrl.u32 %v1717, 7
        %v1719 = vsub.s32 0, %v1718
        %v1720 = vrot.slane %v1407, %v1719
        %v1721 = vlaneseq
        %v1722 = vshrl.u32 %v1721, 7
        %v1723 = vsub.s32 0, %v1722
        %v1724 = vrot.slane %v1408, %v1723
        %v1725 = vlaneseq
        %v1726 = vshrl.u32 %v1725, 7
        %v1727 = vsub.s32 0, %v1726
        %v1728 = vrot.slane %v1409, %v1727
        %v1729 = vlaneseq
        %v1730 = vshrl.u32 %v1729, 7
        %v1731 = vsub.s32 0, %v1730
        %v1732 = vrot.slane %v1410, %v1731
        %v1733 = vlaneseq
        %v1734 = vshrl.u32 %v1733, 7
        %v1735 = vsub.s32 0, %v1734
        %v1736 = vrot.slane %v1411, %v1735
        %v1737 = vlaneseq
        %v1738 = vshrl.u32 %v1737, 7
        %v1739 = vsub.s32 0, %v1738
        %v1740 = vrot.slane %v1412, %v1739
        %v1741 = vlaneseq
        %v1742 = vshrl.u32 %v1741, 7
        %v1743 = vsub.s32 0, %v1742
        %v1744 = vrot.slane %v1413, %v1743
        %v1745 = vlaneseq
        %v1746 = vshrl.u32 %v1745, 7
        %v1747 = vsub.s32 0, %v1746
        %v1748 = vrot.slane %v1414, %v1747
        %v1749 = vmul.f32 %v1720, %v1702
        %v1750 = vmul.f32 %v1724, %v1704
        %v1751 = vmul.f32 %v1728, %v1706
        %v1752 = vmul.f32 %v1732, %v1708
        %v1753 = vmul.f32 %v1736, %v1710
        %v1754 = vmul.f32 %v1740, %v1712
        %v1755 = vmul.f32 %v1744, %v1714
        %v1756 = vmul.f32 %v1748, %v1716
        %v1757 = vlaneseq
        %v1758 = vshrl.u32 %v1757, 7
        %v1759 = vsub.s32 0, %v1758
        %v1760 = vrot.slane %v400, %v1759
        %v1761 = vlaneseq
        %v1762 = vshrl.u32 %v1761, 7
        %v1763 = vsub.s32 0, %v1762
        %v1764 = vrot.slane %v402, %v1763
        %v1765 = vlaneseq
        %v1766 = vshrl.u32 %v1765, 7
        %v1767 = vsub.s32 0, %v1766
        %v1768 = vrot.slane %v404, %v1767
        %v1769 = vlaneseq
        %v1770 = vshrl.u32 %v1769, 7
        %v1771 = vsub.s32 0, %v1770
        %v1772 = vrot.slane %v406, %v1771
        %v1773 = vlaneseq
        %v1774 = vshrl.u32 %v1773, 7
        %v1775 = vsub.s32 0, %v1774
        %v1776 = vrot.slane %v408, %v1775
        %v1777 = vlaneseq
        %v1778 = vshrl.u32 %v1777, 7
        %v1779 = vsub.s32 0, %v1778
        %v1780 = vrot.slane %v410, %v1779
        %v1781 = vlaneseq
        %v1782 = vshrl.u32 %v1781, 7
        %v1783 = vsub.s32 0, %v1782
        %v1784 = vrot.slane %v412, %v1783
        %v1785 = vlaneseq
        %v1786 = vshrl.u32 %v1785, 7
        %v1787 = vsub.s32 0, %v1786
        %v1788 = vrot.slane %v414, %v1787
        %v1789 = vmul.f32 %v1760, %v1540
        %v1790 = vmul.f32 %v1764, %v1540
        %v1791 = vmul.f32 %v1768, %v1540
        %v1792 = vmul.f32 %v1772, %v1540
        %v1793 = vmul.f32 %v1776, %v1540
        %v1794 = vmul.f32 %v1780, %v1540
        %v1795 = vmul.f32 %v1784, %v1540
        %v1796 = vmul.f32 %v1788, %v1540
        %v1797 = vadd.f32 %v1789, 1.0
        %v1798 = vadd.f32 %v1790, 1.0
        %v1799 = vadd.f32 %v1791, 1.0
        %v1800 = vadd.f32 %v1792, 1.0
        %v1801 = vadd.f32 %v1793, 1.0
        %v1802 = vadd.f32 %v1794, 1.0
        %v1803 = vadd.f32 %v1795, 1.0
        %v1804 = vadd.f32 %v1796, 1.0
        %v1805 = vlaneseq
        %v1806 = vshrl.u32 %v1805, 7
        %v1807 = vsub.s32 0, %v1806
        %v1808 = vrot.slane %v445, %v1807
        %v1809 = vlaneseq
        %v1810 = vshrl.u32 %v1809, 7
        %v1811 = vsub.s32 0, %v1810
        %v1812 = vrot.slane %v452, %v1811
        %v1813 = vlaneseq
        %v1814 = vshrl.u32 %v1813, 7
        %v1815 = vsub.s32 0, %v1814
        %v1816 = vrot.slane %v459, %v1815
        %v1817 = vlaneseq
        %v1818 = vshrl.u32 %v1817, 7
        %v1819 = vsub.s32 0, %v1818
        %v1820 = vrot.slane %v466, %v1819
        %v1821 = vlaneseq
        %v1822 = vshrl.u32 %v1821, 7
        %v1823 = vsub.s32 0, %v1822
        %v1824 = vrot.slane %v473, %v1823
        %v1825 = vlaneseq
        %v1826 = vshrl.u32 %v1825, 7
        %v1827 = vsub.s32 0, %v1826
        %v1828 = vrot.slane %v480, %v1827
        %v1829 = vlaneseq
        %v1830 = vshrl.u32 %v1829, 7
        %v1831 = vsub.s32 0, %v1830
        %v1832 = vrot.slane %v487, %v1831
        %v1833 = vlaneseq
        %v1834 = vshrl.u32 %v1833, 7
        %v1835 = vsub.s32 0, %v1834
        %v1836 = vrot.slane %v494, %v1835
        %v1837 = vmul.f32 %v1808, %v1644
        %v1838 = vmul.f32 %v1812, %v1644
        %v1839 = vmul.f32 %v1816, %v1644
        %v1840 = vmul.f32 %v1820, %v1644
        %v1841 = vmul.f32 %v1824, %v1644
        %v1842 = vmul.f32 %v1828, %v1644
        %v1843 = vmul.f32 %v1832, %v1644
        %v1844 = vmul.f32 %v1836, %v1644
        %v1845 = vadd.f32 %v1797, %v1837
        %v1846 = vadd.f32 %v1798, %v1838
        %v1847 = vadd.f32 %v1799, %v1839
        %v1848 = vadd.f32 %v1800, %v1840
        %v1849 = vadd.f32 %v1801, %v1841
        %v1850 = vadd.f32 %v1802, %v1842
        %v1851 = vadd.f32 %v1803, %v1843
        %v1852 = vadd.f32 %v1804, %v1844
        %v1853 = vmul.f32 %v1845, 0.5
        %v1854 = vmul.f32 %v1846, 0.5
        %v1855 = vmul.f32 %v1847, 0.5
        %v1856 = vmul.f32 %v1848, 0.5
        %v1857 = vmul.f32 %v1849, 0.5
        %v1858 = vmul.f32 %v1850, 0.5
        %v1859 = vmul.f32 %v1851, 0.5
        %v1860 = vmul.f32 %v1852, 0.5
        %v1861 = vpow.f32 %v1853, 14.1
        %v1862 = vpow.f32 %v1854, 14.1
        %v1863 = vpow.f32 %v1855, 14.1
        %v1864 = vpow.f32 %v1856, 14.1
        %v1865 = vpow.f32 %v1857, 14.1
        %v1866 = vpow.f32 %v1858, 14.1
        %v1867 = vpow.f32 %v1859, 14.1
        %v1868 = vpow.f32 %v1860, 14.1
        %v1869 = vlaneseq
        %v1870 = vshrl.u32 %v1869, 7
        %v1871 = vsub.s32 0, %v1870
        %v1872 = vrot.slane %v1861, %v1871
        %v1873 = vlaneseq
        %v1874 = vshrl.u32 %v1873, 7
        %v1875 = vsub.s32 0, %v1874
        %v1876 = vrot.slane %v1862, %v1875
        %v1877 = vlaneseq
        %v1878 = vshrl.u32 %v1877, 7
        %v1879 = vsub.s32 0, %v1878
        %v1880 = vrot.slane %v1863, %v1879
        %v1881 = vlaneseq
        %v1882 = vshrl.u32 %v1881, 7
        %v1883 = vsub.s32 0, %v1882
        %v1884 = vrot.slane %v1864, %v1883
        %v1885 = vlaneseq
        %v1886 = vshrl.u32 %v1885, 7
        %v1887 = vsub.s32 0, %v1886
        %v1888 = vrot.slane %v1865, %v1887
        %v1889 = vlaneseq
        %v1890 = vshrl.u32 %v1889, 7
        %v1891 = vsub.s32 0, %v1890
        %v1892 = vrot.slane %v1866, %v1891
        %v1893 = vlaneseq
        %v1894 = vshrl.u32 %v1893, 7
        %v1895 = vsub.s32 0, %v1894
        %v1896 = vrot.slane %v1867, %v1895
        %v1897 = vlaneseq
        %v1898 = vshrl.u32 %v1897, 7
        %v1899 = vsub.s32 0, %v1898
        %v1900 = vrot.slane %v1868, %v1899
        %v1901 = vmul.f32 %v1872, %v1749
        %v1902 = vmul.f32 %v1876, %v1750
        %v1903 = vmul.f32 %v1880, %v1751
        %v1904 = vmul.f32 %v1884, %v1752
        %v1905 = vmul.f32 %v1888, %v1753
        %v1906 = vmul.f32 %v1892, %v1754
        %v1907 = vmul.f32 %v1896, %v1755
        %v1908 = vmul.f32 %v1900, %v1756
        %1909 = vst [vmem:[%s132] sm:$0xff] %v1901
        %1910 = vst [vmem:[%s132 + $0x8] sm:$0xff] %v1902
        %1911 = vst [vmem:[%s132 + $0x10] sm:$0xff] %v1903
        %1912 = vst [vmem:[%s132 + $0x18] sm:$0xff] %v1904
        %1913 = vst [vmem:[%s132 + $0x20] sm:$0xff] %v1905
        %1914 = vst [vmem:[%s132 + $0x28] sm:$0xff] %v1906
        %1915 = vst [vmem:[%s132 + $0x30] sm:$0xff] %v1907
        %1916 = vst [vmem:[%s132 + $0x38] sm:$0xff] %v1908
        %v1917 = vlaneseq
        %v1918 = vshrl.u32 %v1917, 7
        %v1919 = vsub.s32 1, %v1918
        %v1920 = vrot.slane %v1861, %v1919
        %v1921 = vlaneseq
        %v1922 = vshrl.u32 %v1921, 7
        %v1923 = vsub.s32 1, %v1922
        %v1924 = vrot.slane %v1862, %v1923
        %v1925 = vlaneseq
        %v1926 = vshrl.u32 %v1925, 7
        %v1927 = vsub.s32 1, %v1926
        %v1928 = vrot.slane %v1863, %v1927
        %v1929 = vlaneseq
        %v1930 = vshrl.u32 %v1929, 7
        %v1931 = vsub.s32 1, %v1930
        %v1932 = vrot.slane %v1864, %v1931
        %v1933 = vlaneseq
        %v1934 = vshrl.u32 %v1933, 7
        %v1935 = vsub.s32 1, %v1934
        %v1936 = vrot.slane %v1865, %v1935
        %v1937 = vlaneseq
        %v1938 = vshrl.u32 %v1937, 7
        %v1939 = vsub.s32 1, %v1938
        %v1940 = vrot.slane %v1866, %v1939
        %v1941 = vlaneseq
        %v1942 = vshrl.u32 %v1941, 7
        %v1943 = vsub.s32 1, %v1942
        %v1944 = vrot.slane %v1867, %v1943
        %v1945 = vlaneseq
        %v1946 = vshrl.u32 %v1945, 7
        %v1947 = vsub.s32 1, %v1946
        %v1948 = vrot.slane %v1868, %v1947
        %v1949 = vmul.f32 %v1920, %v1749
        %v1950 = vmul.f32 %v1924, %v1750
        %v1951 = vmul.f32 %v1928, %v1751
        %v1952 = vmul.f32 %v1932, %v1752
        %v1953 = vmul.f32 %v1936, %v1753
        %v1954 = vmul.f32 %v1940, %v1754
        %v1955 = vmul.f32 %v1944, %v1755
        %v1956 = vmul.f32 %v1948, %v1756
        %s1957 = scalar_lea.vmem %s132, 64 [#allocation5]
        %1958 = vst [vmem:[%s1957] sm:$0xff] %v1949
        %1959 = vst [vmem:[%s1957 + $0x8] sm:$0xff] %v1950
        %1960 = vst [vmem:[%s1957 + $0x10] sm:$0xff] %v1951
        %1961 = vst [vmem:[%s1957 + $0x18] sm:$0xff] %v1952
        %1962 = vst [vmem:[%s1957 + $0x20] sm:$0xff] %v1953
        %1963 = vst [vmem:[%s1957 + $0x28] sm:$0xff] %v1954
        %1964 = vst [vmem:[%s1957 + $0x30] sm:$0xff] %v1955
        %1965 = vst [vmem:[%s1957 + $0x38] sm:$0xff] %v1956
        %v1966 = vlaneseq
        %v1967 = vshrl.u32 %v1966, 7
        %v1968 = vsub.s32 2, %v1967
        %v1969 = vrot.slane %v1861, %v1968
        %v1970 = vlaneseq
        %v1971 = vshrl.u32 %v1970, 7
        %v1972 = vsub.s32 2, %v1971
        %v1973 = vrot.slane %v1862, %v1972
        %v1974 = vlaneseq
        %v1975 = vshrl.u32 %v1974, 7
        %v1976 = vsub.s32 2, %v1975
        %v1977 = vrot.slane %v1863, %v1976
        %v1978 = vlaneseq
        %v1979 = vshrl.u32 %v1978, 7
        %v1980 = vsub.s32 2, %v1979
        %v1981 = vrot.slane %v1864, %v1980
        %v1982 = vlaneseq
        %v1983 = vshrl.u32 %v1982, 7
        %v1984 = vsub.s32 2, %v1983
        %v1985 = vrot.slane %v1865, %v1984
        %v1986 = vlaneseq
        %v1987 = vshrl.u32 %v1986, 7
        %v1988 = vsub.s32 2, %v1987
        %v1989 = vrot.slane %v1866, %v1988
        %v1990 = vlaneseq
        %v1991 = vshrl.u32 %v1990, 7
        %v1992 = vsub.s32 2, %v1991
        %v1993 = vrot.slane %v1867, %v1992
        %v1994 = vlaneseq
        %v1995 = vshrl.u32 %v1994, 7
        %v1996 = vsub.s32 2, %v1995
        %v1997 = vrot.slane %v1868, %v1996
        %v1998 = vmul.f32 %v1969, %v1749
        %v1999 = vmul.f32 %v1973, %v1750
        %v2000 = vmul.f32 %v1977, %v1751
        %v2001 = vmul.f32 %v1981, %v1752
        %v2002 = vmul.f32 %v1985, %v1753
        %v2003 = vmul.f32 %v1989, %v1754
        %v2004 = vmul.f32 %v1993, %v1755
        %v2005 = vmul.f32 %v1997, %v1756
        %s2006 = scalar_lea.vmem %s132, 128 [#allocation5]
        %2007 = vst [vmem:[%s2006] sm:$0xff] %v1998
        %2008 = vst [vmem:[%s2006 + $0x8] sm:$0xff] %v1999
        %2009 = vst [vmem:[%s2006 + $0x10] sm:$0xff] %v2000
        %2010 = vst [vmem:[%s2006 + $0x18] sm:$0xff] %v2001
        %2011 = vst [vmem:[%s2006 + $0x20] sm:$0xff] %v2002
        %2012 = vst [vmem:[%s2006 + $0x28] sm:$0xff] %v2003
        %2013 = vst [vmem:[%s2006 + $0x30] sm:$0xff] %v2004
        %2014 = vst [vmem:[%s2006 + $0x38] sm:$0xff] %v2005
        %v2015 = vlaneseq
        %v2016 = vshrl.u32 %v2015, 7
        %v2017 = vsub.s32 3, %v2016
        %v2018 = vrot.slane %v1861, %v2017
        %v2019 = vlaneseq
        %v2020 = vshrl.u32 %v2019, 7
        %v2021 = vsub.s32 3, %v2020
        %v2022 = vrot.slane %v1862, %v2021
        %v2023 = vlaneseq
        %v2024 = vshrl.u32 %v2023, 7
        %v2025 = vsub.s32 3, %v2024
        %v2026 = vrot.slane %v1863, %v2025
        %v2027 = vlaneseq
        %v2028 = vshrl.u32 %v2027, 7
        %v2029 = vsub.s32 3, %v2028
        %v2030 = vrot.slane %v1864, %v2029
        %v2031 = vlaneseq
        %v2032 = vshrl.u32 %v2031, 7
        %v2033 = vsub.s32 3, %v2032
        %v2034 = vrot.slane %v1865, %v2033
        %v2035 = vlaneseq
        %v2036 = vshrl.u32 %v2035, 7
        %v2037 = vsub.s32 3, %v2036
        %v2038 = vrot.slane %v1866, %v2037
        %v2039 = vlaneseq
        %v2040 = vshrl.u32 %v2039, 7
        %v2041 = vsub.s32 3, %v2040
        %v2042 = vrot.slane %v1867, %v2041
        %v2043 = vlaneseq
        %v2044 = vshrl.u32 %v2043, 7
        %v2045 = vsub.s32 3, %v2044
        %v2046 = vrot.slane %v1868, %v2045
        %v2047 = vmul.f32 %v2018, %v1749
        %v2048 = vmul.f32 %v2022, %v1750
        %v2049 = vmul.f32 %v2026, %v1751
        %v2050 = vmul.f32 %v2030, %v1752
        %v2051 = vmul.f32 %v2034, %v1753
        %v2052 = vmul.f32 %v2038, %v1754
        %v2053 = vmul.f32 %v2042, %v1755
        %v2054 = vmul.f32 %v2046, %v1756
        %s2055 = scalar_lea.vmem %s132, 192 [#allocation5]
        %2056 = vst [vmem:[%s2055] sm:$0xff] %v2047
        %2057 = vst [vmem:[%s2055 + $0x8] sm:$0xff] %v2048
        %2058 = vst [vmem:[%s2055 + $0x10] sm:$0xff] %v2049
        %2059 = vst [vmem:[%s2055 + $0x18] sm:$0xff] %v2050
        %2060 = vst [vmem:[%s2055 + $0x20] sm:$0xff] %v2051
        %2061 = vst [vmem:[%s2055 + $0x28] sm:$0xff] %v2052
        %2062 = vst [vmem:[%s2055 + $0x30] sm:$0xff] %v2053
        %2063 = vst [vmem:[%s2055 + $0x38] sm:$0xff] %v2054
        %s2064 = sand.u32 %s52, 1
        %s2065 = scalar_lea.sflag [#allocation4], %s2064
        %s2066 = sand.u32 %s52, 1
        %s2067 = smul.addr %s2066, 256
        %s2068 = scalar_lea.vmem [#allocation5], %s2067
        // Predicated region
        $region29: #{tpu_custom_call.1} parent=23 // pred_check
          %p2069 = pneg %p62
        $region30: #{tpu_custom_call.1} parent=23 // pred_check_branch
          %2071 = sbr.rel (%p2069) target = $region32
        $region31: #{tpu_custom_call.1} parent=23 // pred_region
          %s2072 = smul.u32 8, %s18
          %s2074 = ssub.s32 4096, 4096
          %2075 = vsyncadd %s2065, %s2074
          %s2076 = smul.addr %s2072, 128
          %s2077 = scalar_lea.hbm %s1, %s2076
          %s2078 = sshll.u32 %s2068, 4
          %s2079 = int_to_ptr.vmem [resolvable:$true] %s2078
          %2084 = dma.vmem_to_hbm [thread:$0]  %s2079, 4096, %s2077, %s2065, 1024, 4096, 64
        $region32: #{tpu_custom_call.1} parent=23 // pred_fallthru
          _
      $region24: #{tpu_custom_call.1} parent=5 // pred_fallthru
        _
      %p2085 = scmp.le.s32.totalorder 2, %s13
      // Predicated region
      $region33: #{tpu_custom_call.1} parent=5 // pred_check
        %p2086 = pneg %p2085
      $region34: #{tpu_custom_call.1} parent=5 // pred_check_branch
        %2088 = sbr.rel (%p2086) target = $region36
      $region35: #{tpu_custom_call.1} parent=5 // pred_region
        %s2089 = ssub.s32 %s13, 2
        // Predicated region
        $region37: #{tpu_custom_call.1} parent=35 // pred_check
          %p2090 = pneg %p68
        $region38: #{tpu_custom_call.1} parent=35 // pred_check_branch
          %2092 = sbr.rel (%p2090) target = $region40
        $region39: #{tpu_custom_call.1} parent=35 // pred_region
          %s2093 = sand.u32 %s53, 1
          %s2094 = scalar_lea.sflag [#allocation4], %s2093
          %s2095 = sand.u32 %s53, 1
          %s2096 = smul.addr %s2095, 256
          %s2097 = scalar_lea.vmem [#allocation5], %s2096
          %2098 = dma.done %s2094, 4096
        $region40: #{tpu_custom_call.1} parent=35 // pred_fallthru
          _
      $region36: #{tpu_custom_call.1} parent=5 // pred_fallthru
        _
    $region6: #{tpu_custom_call.1} parent=1 // loop_footer
      %s17 = sadd.s32 1, %s13
    $region7: #{tpu_custom_call.1} parent=1 // loop_footer_branch
      %12 = sbr.rel target = $region3
    $region8: #{tpu_custom_call.1} parent=1 // loop_exit
      _
    %2099 = vsyncpa [#allocation3], 1
    %s2100 = scalar_lea.sflag [#allocation3], 1
    %2101 = vsyncpa %s2100, 1
    %2102 = vsyncpa [#allocation4], 1
    %s2103 = scalar_lea.sflag [#allocation4], 1
    %2104 = vsyncpa %s2103, 1

</llo_original>
